<compile_context>
chip_gen: v5e
topology: v5e:2x2
jax: 0.10.0
libtpu: 0.0.40
codegen_flags: <defaults>
</compile_context>

<pallas_src>
import functools

import jax
import jax.numpy as jnp
from jax import lax
from jax.experimental import pallas as pl
from jax.experimental.pallas import tpu as pltpu


TAPS3x3 = tuple((a, b) for a in range(3) for b in range(3))
TAPS2x2 = ((0, 0), (0, 1), (1, 0), (1, 1))


# ----------------------------------------------------------------------------
# Fused MeanVFE + per-voxel MLP (VoxelBackBone8x proxy), tiled over voxels
# ----------------------------------------------------------------------------
def _voxel_feat_kernel(vox_ref, npts_ref, w1_ref, b1_ref, w2_ref, b2_ref,
                       vf_ref, feat_ref):
    bn, P, C = vox_ref.shape
    n = npts_ref[...]                                    # (bn, 1) f32
    acc = jnp.zeros((bn, C), jnp.float32)
    for p in range(P):                                   # P is small & static
        vp = vox_ref[:, p, :]                            # (bn, C)
        acc = acc + jnp.where(jnp.float32(p) < n, vp, 0.0)
    vf = acc / jnp.maximum(n, 1.0)                       # MeanVFE
    vf_ref[...] = vf
    h = jnp.dot(vf.astype(jnp.bfloat16), w1_ref[...],
                preferred_element_type=jnp.float32) + b1_ref[...]
    h = jnp.maximum(h, 0.0)
    h = jnp.dot(h.astype(jnp.bfloat16), w2_ref[...],
                preferred_element_type=jnp.float32) + b2_ref[...]
    h = jnp.maximum(h, 0.0)
    feat_ref[...] = h.astype(jnp.bfloat16)


def _voxel_block_size(n):
    for d in (512, 256, 128, 64, 32, 16, 8):
        if d < n and n % d == 0:
            return d
    return n


def voxel_features(voxels, voxel_num_points, params):
    """Fused MeanVFE + per-voxel MLP, grid over voxel chunks (parallel)."""
    N, P, C = voxels.shape
    npts = voxel_num_points.astype(jnp.float32).reshape(N, 1)
    bn = _voxel_block_size(N)
    return pl.pallas_call(
        _voxel_feat_kernel,
        out_shape=(jax.ShapeDtypeStruct((N, C), jnp.float32),
                   jax.ShapeDtypeStruct((N, 128), jnp.bfloat16)),
        grid=(N // bn,),
        in_specs=[pl.BlockSpec((bn, P, C), lambda i: (i, 0, 0)),
                  pl.BlockSpec((bn, 1), lambda i: (i, 0)),
                  pl.BlockSpec((C, 32), lambda i: (0, 0)),
                  pl.BlockSpec((1, 32), lambda i: (0, 0)),
                  pl.BlockSpec((32, 128), lambda i: (0, 0)),
                  pl.BlockSpec((1, 128), lambda i: (0, 0))],
        out_specs=(pl.BlockSpec((bn, C), lambda i: (i, 0)),
                   pl.BlockSpec((bn, 128), lambda i: (i, 0))),
        compiler_params=pltpu.CompilerParams(
            dimension_semantics=("parallel",)),
    )(voxels.astype(jnp.float32), npts,
      params["w_v1"], params["b_v1"], params["w_v2"], params["b_v2"])


# ----------------------------------------------------------------------------
# Pallas scatter-max onto the flattened BEV grid (coords prefetched to SMEM)
# ----------------------------------------------------------------------------
def _scatter_max_kernel(rows_ref, feat_ref, out_ref, *, n_voxels):
    out_ref[...] = jnp.zeros(out_ref.shape, out_ref.dtype)

    def body(i, carry):
        r = rows_ref[i]
        cur = out_ref[pl.ds(r, 1), :]
        out_ref[pl.ds(r, 1), :] = jnp.maximum(cur, feat_ref[pl.ds(i, 1), :])
        return carry

    lax.fori_loop(0, n_voxels, body, 0)


def scatter_max(rows, feat, num_rows):
    """Dense scatter-max of per-voxel features.  Zero init is valid because
    features are post-ReLU (>= 0).
    TODO(synk): for 100k+ voxels, sort by cell / chunk the loop and overlap
    the coord prefetch with stores."""
    N, Cf = feat.shape
    return pl.pallas_call(
        functools.partial(_scatter_max_kernel, n_voxels=N),
        out_shape=jax.ShapeDtypeStruct((num_rows, Cf), feat.dtype),
        grid_spec=pltpu.PrefetchScalarGridSpec(
            num_scalar_prefetch=1,
            grid=(1,),
            in_specs=[pl.BlockSpec((N, Cf), lambda i, rows: (0, 0))],
            out_specs=pl.BlockSpec((num_rows, Cf), lambda i, rows: (0, 0))),
        compiler_params=pltpu.CompilerParams(
            dimension_semantics=("arbitrary",)),
    )(rows, feat)


# ----------------------------------------------------------------------------
# Fused BEV block: N conv layers, activation resident in VMEM, taps in-kernel
# ----------------------------------------------------------------------------
def _bev_block_kernel(x_ref, w0_ref, wr_ref, o_ref, scr_in, scr_a, scr_b,
                      *, taps0):
    Hc, Wc, _ = x_ref.shape
    cout = o_ref.shape[-1]
    n_rest = wr_ref.shape[0]

    # Zero-halo padded ping-pong scratch.  Interiors are always rewritten
    # before being read, so full zeroing each grid step is safe under any core
    # scheduling.  TODO(synk): zero only halos / tile over row slabs for
    # KITTI-scale BEV grids (v7x 64 MiB VMEM budget).
    scr_in[...] = jnp.zeros(scr_in.shape, scr_in.dtype)
    scr_a[...] = jnp.zeros(scr_a.shape, scr_a.dtype)
    scr_b[...] = jnp.zeros(scr_b.shape, scr_b.dtype)
    scr_in[1:Hc + 1, 1:Wc + 1, :] = x_ref[...]

    def conv(src, get_w, offsets):
        cin = src.shape[-1]
        acc = jnp.zeros((Hc * Wc, cout), jnp.float32)
        for t, (dh, dw) in enumerate(offsets):
            tap = src[dh:dh + Hc, dw:dw + Wc, :]          # VMEM-resident tap
            acc = acc + jnp.dot(tap.reshape(Hc * Wc, cin), get_w(t),
                                preferred_element_type=jnp.float32)
        return jnp.maximum(acc, 0.0).reshape(Hc, Wc, cout).astype(jnp.bfloat16)

    y = conv(scr_in, lambda t: w0_ref[t], taps0)          # layer 0
    bufs = (scr_a, scr_b)
    for layer in range(1, n_rest + 1):                    # layers 1..n_rest
        dst = bufs[(layer - 1) % 2]
        dst[1:Hc + 1, 1:Wc + 1, :] = y
        y = conv(dst, lambda t, l=layer - 1: wr_ref[l, t], TAPS3x3)
    o_ref[...] = y                                        # only HBM write


def bev_block(x, w0, wr, taps0):
    B, Hc, Wc, Cin = x.shape
    Cout = w0.shape[-1]
    return pl.pallas_call(
        functools.partial(_bev_block_kernel, taps0=taps0),
        out_shape=jax.ShapeDtypeStruct((B, Hc, Wc, Cout), jnp.bfloat16),
        grid=(B,),
        in_specs=[pl.BlockSpec((None, Hc, Wc, Cin), lambda b: (b, 0, 0, 0)),
                  pl.BlockSpec(w0.shape, lambda b: (0, 0, 0)),
                  pl.BlockSpec(wr.shape, lambda b: (0, 0, 0, 0))],
        out_specs=pl.BlockSpec((None, Hc, Wc, Cout), lambda b: (b, 0, 0, 0)),
        scratch_shapes=[pltpu.VMEM((Hc + 2, Wc + 2, Cin), jnp.bfloat16),
                        pltpu.VMEM((Hc + 2, Wc + 2, Cout), jnp.bfloat16),
                        pltpu.VMEM((Hc + 2, Wc + 2, Cout), jnp.bfloat16)],
        compiler_params=pltpu.CompilerParams(
            dimension_semantics=("parallel",)),
    )(x, w0, wr)


# ----------------------------------------------------------------------------
# ConvTranspose2d(k=2, s=2) + folded BN + ReLU, direct-layout output
# ----------------------------------------------------------------------------
def _deconv2x2_kernel(x_ref, w_ref, o_ref):
    Ho, Wo, Cin = x_ref.shape
    C2 = w_ref.shape[-1]
    xf = x_ref[...].reshape(Ho * Wo, Cin)
    for a in range(2):
        y = jnp.dot(xf, w_ref[a], preferred_element_type=jnp.float32)
        y = jnp.maximum(y, 0.0).astype(jnp.bfloat16)
        o_ref[:, a:a + 1, :, :] = y.reshape(Ho, 1, Wo, C2)


def deconv2x2(x, w):
    """Output is (B, Ho, 2, Wo, 2*Cout) so the 2x upsample is a free
    contiguous reshape in glue -- no pixel-shuffle transpose pass."""
    B, Ho, Wo, Cin = x.shape
    C2 = w.shape[-1]
    return pl.pallas_call(
        _deconv2x2_kernel,
        out_shape=jax.ShapeDtypeStruct((B, Ho, 2, Wo, C2), jnp.bfloat16),
        grid=(B,),
        in_specs=[pl.BlockSpec((None, Ho, Wo, Cin), lambda b: (b, 0, 0, 0)),
                  pl.BlockSpec((2, Cin, C2), lambda b: (0, 0, 0))],
        out_specs=pl.BlockSpec((None, Ho, 2, Wo, C2),
                               lambda b: (b, 0, 0, 0, 0)),
        compiler_params=pltpu.CompilerParams(
            dimension_semantics=("parallel",)),
    )(x, w)


# ----------------------------------------------------------------------------
# deblocks[0] 1x1 conv + concat + fused AnchorHeadSingle 1x1 heads
# ----------------------------------------------------------------------------
def _head_kernel(x1_ref, up2_ref, wde1_ref, wh1_ref, wh2_ref, bh_ref,
                 feat_ref, head_ref):
    Hc, Wc, C1 = x1_ref.shape
    x1 = x1_ref[...].reshape(Hc * Wc, C1)
    up1 = jnp.maximum(jnp.dot(x1, wde1_ref[...],
                              preferred_element_type=jnp.float32), 0.0)
    up2 = up2_ref[...].reshape(Hc * Wc, 128)
    # spatial_features_2d = concat([up1, up2], -1), assembled in-kernel
    feat_ref[:, :, :128] = up1.reshape(Hc, Wc, 128).astype(jnp.bfloat16)
    feat_ref[:, :, 128:] = up2_ref[...]
    # fused cls/box/dir heads, lane-padded to 128; kept in f32 for precision.
    head = (jnp.dot(up1, wh1_ref[...], preferred_element_type=jnp.float32)
            + jnp.dot(up2.astype(jnp.float32), wh2_ref[...],
                      preferred_element_type=jnp.float32)
            + bh_ref[...])
    head_ref[...] = head.reshape(Hc, Wc, 128)


def bev_head(x1, up2, params):
    B, Hc, Wc, C1 = x1.shape
    return pl.pallas_call(
        _head_kernel,
        out_shape=(jax.ShapeDtypeStruct((B, Hc, Wc, 256), jnp.bfloat16),
                   jax.ShapeDtypeStruct((B, Hc, Wc, 128), jnp.float32)),
        grid=(B,),
        in_specs=[pl.BlockSpec((None, Hc, Wc, C1), lambda b: (b, 0, 0, 0)),
                  pl.BlockSpec((None, Hc, Wc, 128), lambda b: (b, 0, 0, 0)),
                  pl.BlockSpec((C1, 128), lambda b: (0, 0)),
                  pl.BlockSpec((128, 128), lambda b: (0, 0)),
                  pl.BlockSpec((128, 128), lambda b: (0, 0)),
                  pl.BlockSpec((1, 128), lambda b: (0, 0))],
        out_specs=(pl.BlockSpec((None, Hc, Wc, 256), lambda b: (b, 0, 0, 0)),
                   pl.BlockSpec((None, Hc, Wc, 128), lambda b: (b, 0, 0, 0))),
        compiler_params=pltpu.CompilerParams(
            dimension_semantics=("parallel",)),
    )(x1, up2, params["w_de1"], params["w_h1"], params["w_h2"],
      params["b_head"])


# ----------------------------------------------------------------------------
# Parameters (deterministic synthetic init, shapes implied by the module cfg)
# ----------------------------------------------------------------------------
def init_params(key):
    ks = iter(jax.random.split(key, 16))
    bn_s = 1.0 / jnp.sqrt(1.0 + 1e-3)   # eval-mode BN folded as a scalar
    # TODO(synk): real checkpoints need per-channel BN folding into w and b.
    bf = jnp.bfloat16

    def conv9(cin, cout):
        w = jax.random.normal(next(ks), (9, cin, cout), jnp.float32)
        return (w * jnp.sqrt(2.0 / (9 * cin)) * bn_s).astype(bf)

    def conv9_stack(n, cin, cout):
        w = jax.random.normal(next(ks), (n, 9, cin, cout), jnp.float32)
        return (w * jnp.sqrt(2.0 / (9 * cin)) * bn_s).astype(bf)

    def s2d_stride2(cin, cout):
        # 3x3 stride-2 conv re-expressed as a 4-tap conv over the
        # space-to-depth input: wq[u*2+v, (dy*2+dx)*cin + c, co]
        w3 = (jax.random.normal(next(ks), (3, 3, cin, cout), jnp.float32)
              * jnp.sqrt(2.0 / (9 * cin)) * bn_s)
        wq = jnp.zeros((2, 2, 2, 2, cin, cout), jnp.float32)
        for u in range(2):
            for v in range(2):
                for dy in range(2):
                    for dx in range(2):
                        a, b = 2 * u + dy - 1, 2 * v + dx - 1
                        if 0 <= a <= 2 and 0 <= b <= 2:
                            wq = wq.at[u, v, dy, dx].set(w3[a, b])
        return wq.reshape(4, 4 * cin, cout).astype(bf)

    def lin(cin, cout, std=None):
        s = jnp.sqrt(2.0 / cin) if std is None else std
        return jax.random.normal(next(ks), (cin, cout), jnp.float32) * s

    p = {}
    # VoxelBackBone8x proxy: per-voxel MLP 4 -> 32 -> 128
    p["w_v1"] = lin(4, 32).astype(bf)
    p["b_v1"] = jnp.zeros((1, 32), jnp.float32)
    p["w_v2"] = lin(32, 128).astype(bf)
    p["b_v2"] = jnp.zeros((1, 128), jnp.float32)
    # BaseBEVBackbone: LAYER_NUMS=[5,5], STRIDES=[1,2], FILTERS=[64,128]
    p["b1_w0"] = conv9(256, 64)
    p["b1_wr"] = conv9_stack(5, 64, 64)
    p["b2_w0"] = s2d_stride2(64, 128)          # stride-2 conv, s2d form
    p["b2_wr"] = conv9_stack(5, 128, 128)
    # deblocks: ConvTranspose2d(64,128,1,s=1) and ConvTranspose2d(128,128,2,s=2)
    p["w_de1"] = (lin(64, 128) * bn_s).astype(bf)
    p["w_de2"] = (jax.random.normal(next(ks), (2, 128, 2 * 128), jnp.float32)
                  * jnp.sqrt(2.0 / 128) * bn_s).astype(bf)
    # AnchorHeadSingle: 3 classes x 1 size x 2 rot = 6 anchors/location.
    w_cls = lin(256, 18, std=0.01)
    w_box = lin(256, 42, std=0.001)
    w_dir = lin(256, 12, std=0.01)
    b_head = jnp.concatenate([jnp.full((18,), -jnp.log(99.0), jnp.float32),
                              jnp.zeros((54,), jnp.float32)])
    w_head = jnp.pad(jnp.concatenate([w_cls, w_box, w_dir], axis=1),
                     ((0, 0), (0, 128 - 72)))            # lane-pad to 128
    p["w_h1"] = w_head[:128]                             # applied to up1 (f32)
    p["w_h2"] = w_head[128:]                             # applied to up2 (f32)
    p["b_head"] = jnp.pad(b_head, (0, 128 - 72)).reshape(1, 128)
    return p


# ----------------------------------------------------------------------------
# VoxelRCNN forward
# ----------------------------------------------------------------------------
def voxel_rcnn_forward(batch_dict, params, grid_size):
    nx, ny, nz = grid_size
    B = batch_dict["batch_size"]
    Hf, Wf = ny // 8, nx // 8
    D = 2                                      # z extent after the 3D backbone

    # --- MeanVFE + VoxelBackBone8x proxy (fused Pallas kernel) ---
    # TODO(synk): the real VoxelBackBone8x uses submanifold sparse 3D convs
    # (spconv); approximated by a per-voxel MLP + dense scatter-max.
    vf, vfeat = voxel_features(batch_dict["voxels"],
                               batch_dict["voxel_num_points"], params)

    # --- scatter onto the 8x-downsampled BEV grid (Pallas scatter-max) ---
    coords = batch_dict["voxel_coords"]        # (N, 4): b, z, y, x
    b_i, z_i = coords[:, 0], coords[:, 1] // (nz // D)
    y_i, x_i = coords[:, 2] // 8, coords[:, 3] // 8
    rows = (((b_i * Hf + y_i) * Wf + x_i) * D + z_i).astype(jnp.int32)
    dense = scatter_max(rows, vfeat, B * Hf * Wf * D)     # (B*Hf*Wf*D, 128)

    # --- HeightCompression: free contiguous reshape (channel order z*128+c,
    # equivalent to torch's c*D+z up to a fixed permutation absorbed by the
    # synthetic first BEV conv weights) ---
    spatial = dense.reshape(B, Hf, Wf, D * 128)           # (B, Hf, Wf, 256) bf16

    # --- BaseBEVBackbone: two fused blocks, activations resident in VMEM ---
    x1 = bev_block(spatial, params["b1_w0"], params["b1_wr"], TAPS3x3)
    Ho, Wo = Hf // 2, Wf // 2
    # stride-2 first conv of block2 folded into the block as a 4-tap conv over
    # the space-to-depth input (single cheap glue pass over a 64-ch tensor).
    x1s2d = (x1.reshape(B, Ho, 2, Wo, 2, 64)
               .transpose(0, 1, 3, 2, 4, 5)
               .reshape(B, Ho, Wo, 4 * 64))
    x2 = bev_block(x1s2d, params["b2_w0"], params["b2_wr"], TAPS2x2)

    # --- deblocks[1]: 2x2/s2 deconv, direct-layout output -> free reshape ---
    up2 = deconv2x2(x2, params["w_de2"]).reshape(B, Hf, Wf, 128)

    # --- deblocks[0] 1x1 conv + concat + fused AnchorHeadSingle heads ---
    feat2d, head = bev_head(x1, up2, params)
    cls_preds = head[..., :18]
    box_preds = head[..., 18:60]
    dir_preds = head[..., 60:72]

    # TODO(synk): anchor generation + box decoding, the NMS proposal layer and
    # VoxelRCNNHead's voxel-query ROI grid pooling have no clean Pallas
    # equivalent and are omitted.

    out = dict(batch_dict)
    out.update(voxel_features=vf, spatial_features=spatial,
               spatial_features_2d=feat2d, cls_preds=cls_preds,
               box_preds=box_preds, dir_cls_preds=dir_preds)
    return out


# ----------------------------------------------------------------------------
if __name__ == "__main__":
    key = jax.random.PRNGKey(0)
    kp, kv, kn, kz, ky, kx = jax.random.split(key, 6)
    params = init_params(kp)

    # synthetic config: pcr=[0,0,-1, 25.6,25.6,1], voxel=[0.1,0.1,0.5]
    # -> grid_size=(256,256,4); BEV feature map 32x32 after 8x downsample.
    nx, ny, nz = 256, 256, 4
    batch_size, num_voxels, max_pts, C = 2, 64, 8, 4

    voxels = jax.random.normal(kv, (num_voxels, max_pts, C), jnp.float32)
    voxel_num_points = jax.random.randint(kn, (num_voxels,), 1, max_pts + 1,
                                          dtype=jnp.int32)
    b_idx = jnp.repeat(jnp.arange(batch_size, dtype=jnp.int32),
                       num_voxels // batch_size)
    z = jax.random.randint(kz, (num_voxels,), 0, nz, dtype=jnp.int32)
    y = jax.random.randint(ky, (num_voxels,), 0, ny, dtype=jnp.int32)
    x = jax.random.randint(kx, (num_voxels,), 0, nx, dtype=jnp.int32)
    voxel_coords = jnp.stack([b_idx, z, y, x], axis=1)

    batch_dict = dict(batch_size=batch_size, voxels=voxels,
                      voxel_num_points=voxel_num_points,
                      voxel_coords=voxel_coords)

    out = voxel_rcnn_forward(batch_dict, params, grid_size=(nx, ny, nz))
    jax.block_until_ready(out["cls_preds"])
    jax.block_until_ready(out["box_preds"])
    jax.block_until_ready(out["dir_cls_preds"])

    Hf, Wf = ny // 8, nx // 8
    assert out["spatial_features_2d"].shape == (batch_size, Hf, Wf, 256)
    assert out["cls_preds"].shape == (batch_size, Hf, Wf, 18)
    assert out["box_preds"].shape == (batch_size, Hf, Wf, 42)
    assert out["dir_cls_preds"].shape == (batch_size, Hf, Wf, 12)
    print("KERNEL_OK")
</pallas_src>

<mosaic_0001>
module attributes {stable_mosaic.version = 11 : i64} {
  func.func @_voxel_feat_kernel(%arg0: i32, %arg1: memref<32x8x4xf32, #tpu.memory_space<vmem>>, %arg2: memref<32x1xf32, #tpu.memory_space<vmem>>, %arg3: memref<4x32xbf16, #tpu.memory_space<vmem>>, %arg4: memref<1x32xf32, #tpu.memory_space<vmem>>, %arg5: memref<32x128xbf16, #tpu.memory_space<vmem>>, %arg6: memref<1x128xf32, #tpu.memory_space<vmem>>, %arg7: memref<32x4xf32, #tpu.memory_space<vmem>>, %arg8: memref<32x128xbf16, #tpu.memory_space<vmem>>) attributes {dimension_semantics = [#tpu.dimension_semantics<parallel>], iteration_bounds = array<i64: 2>, scalar_prefetch = 0 : i64, scratch_operands = 0 : i64, tpu.core_type = #tpu.core_type<tc>, window_params = [{transform_indices = @transform_0, window_bounds = array<i64: 32, 8, 4>}, {transform_indices = @transform_1, window_bounds = array<i64: 32, 1>}, {pipeline_mode = #tpu.pipeline_mode<synchronous>, transform_indices = @transform_2, window_bounds = array<i64: 4, 32>}, {pipeline_mode = #tpu.pipeline_mode<synchronous>, transform_indices = @transform_3, window_bounds = array<i64: 1, 32>}, {pipeline_mode = #tpu.pipeline_mode<synchronous>, transform_indices = @transform_4, window_bounds = array<i64: 32, 128>}, {pipeline_mode = #tpu.pipeline_mode<synchronous>, transform_indices = @transform_5, window_bounds = array<i64: 1, 128>}, {transform_indices = @transform_6, window_bounds = array<i64: 32, 4>}, {transform_indices = @transform_7, window_bounds = array<i64: 32, 128>}]} {
    %c0 = arith.constant 0 : index
    %c0_0 = arith.constant 0 : index
    %0 = vector.load %arg2[%c0, %c0_0] : memref<32x1xf32, #tpu.memory_space<vmem>>, vector<32x1xf32>
    %cst = arith.constant 0.000000e+00 : f32
    %1 = vector.broadcast %cst : f32 to vector<32x4xf32>
    %c0_1 = arith.constant 0 : index
    %c0_2 = arith.constant 0 : index
    %c0_3 = arith.constant 0 : index
    %2 = vector.load %arg1[%c0_1, %c0_2, %c0_3] : memref<32x8x4xf32, #tpu.memory_space<vmem>>, vector<32x1x4xf32>
    %3 = vector.shape_cast %2 : vector<32x1x4xf32> to vector<32x4xf32>
    %cst_4 = arith.constant 0.000000e+00 : f32
    %4 = vector.broadcast %cst_4 : f32 to vector<32x1xf32>
    %5 = arith.cmpf olt, %4, %0 : vector<32x1xf32>
    %cst_5 = arith.constant 0.000000e+00 : f32
    %6 = vector.shape_cast %5 : vector<32x1xi1> to vector<32x1xi1>
    %7 = vector.broadcast %6 : vector<32x1xi1> to vector<32x4xi1>
    %8 = vector.broadcast %cst_5 : f32 to vector<32x4xf32>
    %9 = arith.select %7, %3, %8 : vector<32x4xi1>, vector<32x4xf32>
    %10 = arith.addf %1, %9 : vector<32x4xf32>
    %c0_6 = arith.constant 0 : index
    %c1 = arith.constant 1 : index
    %c0_7 = arith.constant 0 : index
    %11 = vector.load %arg1[%c0_6, %c1, %c0_7] : memref<32x8x4xf32, #tpu.memory_space<vmem>>, vector<32x1x4xf32>
    %12 = vector.shape_cast %11 : vector<32x1x4xf32> to vector<32x4xf32>
    %cst_8 = arith.constant 1.000000e+00 : f32
    %13 = vector.broadcast %cst_8 : f32 to vector<32x1xf32>
    %14 = arith.cmpf olt, %13, %0 : vector<32x1xf32>
    %cst_9 = arith.constant 0.000000e+00 : f32
    %15 = vector.shape_cast %14 : vector<32x1xi1> to vector<32x1xi1>
    %16 = vector.broadcast %15 : vector<32x1xi1> to vector<32x4xi1>
    %17 = vector.broadcast %cst_9 : f32 to vector<32x4xf32>
    %18 = arith.select %16, %12, %17 : vector<32x4xi1>, vector<32x4xf32>
    %19 = arith.addf %10, %18 : vector<32x4xf32>
    %c0_10 = arith.constant 0 : index
    %c2 = arith.constant 2 : index
    %c0_11 = arith.constant 0 : index
    %20 = vector.load %arg1[%c0_10, %c2, %c0_11] : memref<32x8x4xf32, #tpu.memory_space<vmem>>, vector<32x1x4xf32>
    %21 = vector.shape_cast %20 : vector<32x1x4xf32> to vector<32x4xf32>
    %cst_12 = arith.constant 2.000000e+00 : f32
    %22 = vector.broadcast %cst_12 : f32 to vector<32x1xf32>
    %23 = arith.cmpf olt, %22, %0 : vector<32x1xf32>
    %cst_13 = arith.constant 0.000000e+00 : f32
    %24 = vector.shape_cast %23 : vector<32x1xi1> to vector<32x1xi1>
    %25 = vector.broadcast %24 : vector<32x1xi1> to vector<32x4xi1>
    %26 = vector.broadcast %cst_13 : f32 to vector<32x4xf32>
    %27 = arith.select %25, %21, %26 : vector<32x4xi1>, vector<32x4xf32>
    %28 = arith.addf %19, %27 : vector<32x4xf32>
    %c0_14 = arith.constant 0 : index
    %c3 = arith.constant 3 : index
    %c0_15 = arith.constant 0 : index
    %29 = vector.load %arg1[%c0_14, %c3, %c0_15] : memref<32x8x4xf32, #tpu.memory_space<vmem>>, vector<32x1x4xf32>
    %30 = vector.shape_cast %29 : vector<32x1x4xf32> to vector<32x4xf32>
    %cst_16 = arith.constant 3.000000e+00 : f32
    %31 = vector.broadcast %cst_16 : f32 to vector<32x1xf32>
    %32 = arith.cmpf olt, %31, %0 : vector<32x1xf32>
    %cst_17 = arith.constant 0.000000e+00 : f32
    %33 = vector.shape_cast %32 : vector<32x1xi1> to vector<32x1xi1>
    %34 = vector.broadcast %33 : vector<32x1xi1> to vector<32x4xi1>
    %35 = vector.broadcast %cst_17 : f32 to vector<32x4xf32>
    %36 = arith.select %34, %30, %35 : vector<32x4xi1>, vector<32x4xf32>
    %37 = arith.addf %28, %36 : vector<32x4xf32>
    %c0_18 = arith.constant 0 : index
    %c4 = arith.constant 4 : index
    %c0_19 = arith.constant 0 : index
    %38 = vector.load %arg1[%c0_18, %c4, %c0_19] : memref<32x8x4xf32, #tpu.memory_space<vmem>>, vector<32x1x4xf32>
    %39 = vector.shape_cast %38 : vector<32x1x4xf32> to vector<32x4xf32>
    %cst_20 = arith.constant 4.000000e+00 : f32
    %40 = vector.broadcast %cst_20 : f32 to vector<32x1xf32>
    %41 = arith.cmpf olt, %40, %0 : vector<32x1xf32>
    %cst_21 = arith.constant 0.000000e+00 : f32
    %42 = vector.shape_cast %41 : vector<32x1xi1> to vector<32x1xi1>
    %43 = vector.broadcast %42 : vector<32x1xi1> to vector<32x4xi1>
    %44 = vector.broadcast %cst_21 : f32 to vector<32x4xf32>
    %45 = arith.select %43, %39, %44 : vector<32x4xi1>, vector<32x4xf32>
    %46 = arith.addf %37, %45 : vector<32x4xf32>
    %c0_22 = arith.constant 0 : index
    %c5 = arith.constant 5 : index
    %c0_23 = arith.constant 0 : index
    %47 = vector.load %arg1[%c0_22, %c5, %c0_23] : memref<32x8x4xf32, #tpu.memory_space<vmem>>, vector<32x1x4xf32>
    %48 = vector.shape_cast %47 : vector<32x1x4xf32> to vector<32x4xf32>
    %cst_24 = arith.constant 5.000000e+00 : f32
    %49 = vector.broadcast %cst_24 : f32 to vector<32x1xf32>
    %50 = arith.cmpf olt, %49, %0 : vector<32x1xf32>
    %cst_25 = arith.constant 0.000000e+00 : f32
    %51 = vector.shape_cast %50 : vector<32x1xi1> to vector<32x1xi1>
    %52 = vector.broadcast %51 : vector<32x1xi1> to vector<32x4xi1>
    %53 = vector.broadcast %cst_25 : f32 to vector<32x4xf32>
    %54 = arith.select %52, %48, %53 : vector<32x4xi1>, vector<32x4xf32>
    %55 = arith.addf %46, %54 : vector<32x4xf32>
    %c0_26 = arith.constant 0 : index
    %c6 = arith.constant 6 : index
    %c0_27 = arith.constant 0 : index
    %56 = vector.load %arg1[%c0_26, %c6, %c0_27] : memref<32x8x4xf32, #tpu.memory_space<vmem>>, vector<32x1x4xf32>
    %57 = vector.shape_cast %56 : vector<32x1x4xf32> to vector<32x4xf32>
    %cst_28 = arith.constant 6.000000e+00 : f32
    %58 = vector.broadcast %cst_28 : f32 to vector<32x1xf32>
    %59 = arith.cmpf olt, %58, %0 : vector<32x1xf32>
    %cst_29 = arith.constant 0.000000e+00 : f32
    %60 = vector.shape_cast %59 : vector<32x1xi1> to vector<32x1xi1>
    %61 = vector.broadcast %60 : vector<32x1xi1> to vector<32x4xi1>
    %62 = vector.broadcast %cst_29 : f32 to vector<32x4xf32>
    %63 = arith.select %61, %57, %62 : vector<32x4xi1>, vector<32x4xf32>
    %64 = arith.addf %55, %63 : vector<32x4xf32>
    %c0_30 = arith.constant 0 : index
    %c7 = arith.constant 7 : index
    %c0_31 = arith.constant 0 : index
    %65 = vector.load %arg1[%c0_30, %c7, %c0_31] : memref<32x8x4xf32, #tpu.memory_space<vmem>>, vector<32x1x4xf32>
    %66 = vector.shape_cast %65 : vector<32x1x4xf32> to vector<32x4xf32>
    %cst_32 = arith.constant 7.000000e+00 : f32
    %67 = vector.broadcast %cst_32 : f32 to vector<32x1xf32>
    %68 = arith.cmpf olt, %67, %0 : vector<32x1xf32>
    %cst_33 = arith.constant 0.000000e+00 : f32
    %69 = vector.shape_cast %68 : vector<32x1xi1> to vector<32x1xi1>
    %70 = vector.broadcast %69 : vector<32x1xi1> to vector<32x4xi1>
    %71 = vector.broadcast %cst_33 : f32 to vector<32x4xf32>
    %72 = arith.select %70, %66, %71 : vector<32x4xi1>, vector<32x4xf32>
    %73 = arith.addf %64, %72 : vector<32x4xf32>
    %cst_34 = arith.constant 1.000000e+00 : f32
    %74 = vector.broadcast %cst_34 : f32 to vector<32x1xf32>
    %75 = arith.maximumf %0, %74 : vector<32x1xf32>
    %76 = vector.broadcast %75 : vector<32x1xf32> to vector<32x4xf32>
    %77 = arith.divf %73, %76 : vector<32x4xf32>
    %c0_35 = arith.constant 0 : index
    %c0_36 = arith.constant 0 : index
    %78 = vector.load %arg7[%c0_35, %c0_36] : memref<32x4xf32, #tpu.memory_space<vmem>>, vector<32x4xf32>
    tpu.vector_store %arg7[%c0_35, %c0_36], %77 {strides = array<i32>} : memref<32x4xf32, #tpu.memory_space<vmem>>, vector<32x4xf32>,
    %79 = arith.truncf %77 : vector<32x4xf32> to vector<32x4xbf16>
    %c0_37 = arith.constant 0 : index
    %c0_38 = arith.constant 0 : index
    %80 = vector.load %arg3[%c0_37, %c0_38] : memref<4x32xbf16, #tpu.memory_space<vmem>>, vector<4x32xbf16>
    %cst_39 = arith.constant dense<0.000000e+00> : vector<32x32xf32>
    %81 = tpu.matmul %79, %80, %cst_39 {dimension_numbers = #tpu.dot_dimension_numbers<[1], [0], [0], [1], [0, 0, 1, 1], [], []>} : vector<32x4xbf16>, vector<4x32xbf16>, vector<32x32xf32> -> vector<32x32xf32>
    %c0_40 = arith.constant 0 : index
    %c0_41 = arith.constant 0 : index
    %82 = vector.load %arg4[%c0_40, %c0_41] : memref<1x32xf32, #tpu.memory_space<vmem>>, vector<1x32xf32>
    %83 = vector.broadcast %82 : vector<1x32xf32> to vector<32x32xf32>
    %84 = arith.addf %81, %83 : vector<32x32xf32>
    %cst_42 = arith.constant 0.000000e+00 : f32
    %85 = vector.broadcast %cst_42 : f32 to vector<32x32xf32>
    %86 = arith.maximumf %84, %85 : vector<32x32xf32>
    %87 = arith.truncf %86 : vector<32x32xf32> to vector<32x32xbf16>
    %c0_43 = arith.constant 0 : index
    %c0_44 = arith.constant 0 : index
    %88 = vector.load %arg5[%c0_43, %c0_44] : memref<32x128xbf16, #tpu.memory_space<vmem>>, vector<32x128xbf16>
    %cst_45 = arith.constant dense<0.000000e+00> : vector<32x128xf32>
    %89 = tpu.matmul %87, %88, %cst_45 {dimension_numbers = #tpu.dot_dimension_numbers<[1], [0], [0], [1], [0, 0, 1, 1], [], []>} : vector<32x32xbf16>, vector<32x128xbf16>, vector<32x128xf32> -> vector<32x128xf32>
    %c0_46 = arith.constant 0 : index
    %c0_47 = arith.constant 0 : index
    %90 = vector.load %arg6[%c0_46, %c0_47] : memref<1x128xf32, #tpu.memory_space<vmem>>, vector<1x128xf32>
    %91 = vector.broadcast %90 : vector<1x128xf32> to vector<32x128xf32>
    %92 = arith.addf %89, %91 : vector<32x128xf32>
    %cst_48 = arith.constant 0.000000e+00 : f32
    %93 = vector.broadcast %cst_48 : f32 to vector<32x128xf32>
    %94 = arith.maximumf %92, %93 : vector<32x128xf32>
    %95 = arith.truncf %94 : vector<32x128xf32> to vector<32x128xbf16>
    %c0_49 = arith.constant 0 : index
    %c0_50 = arith.constant 0 : index
    %96 = vector.load %arg8[%c0_49, %c0_50] : memref<32x128xbf16, #tpu.memory_space<vmem>>, vector<32x128xbf16>
    tpu.vector_store %arg8[%c0_49, %c0_50], %95 {strides = array<i32>} : memref<32x128xbf16, #tpu.memory_space<vmem>>, vector<32x128xbf16>,
    return
  }
  func.func @transform_0(%arg0: i32) -> (i32, i32, i32) {
    %c0_i32 = arith.constant 0 : i32
    %c0_i32_0 = arith.constant 0 : i32
    %c0_i32_1 = arith.constant 0 : i32
    return %arg0, %c0_i32, %c0_i32_0 : i32, i32, i32
  }
  func.func @transform_1(%arg0: i32) -> (i32, i32) {
    %c0_i32 = arith.constant 0 : i32
    %c0_i32_0 = arith.constant 0 : i32
    return %arg0, %c0_i32 : i32, i32
  }
  func.func @transform_2(%arg0: i32) -> (i32, i32) {
    %c0_i32 = arith.constant 0 : i32
    %c0_i32_0 = arith.constant 0 : i32
    %c0_i32_1 = arith.constant 0 : i32
    return %c0_i32, %c0_i32_0 : i32, i32
  }
  func.func @transform_3(%arg0: i32) -> (i32, i32) {
    %c0_i32 = arith.constant 0 : i32
    %c0_i32_0 = arith.constant 0 : i32
    %c0_i32_1 = arith.constant 0 : i32
    return %c0_i32, %c0_i32_0 : i32, i32
  }
  func.func @transform_4(%arg0: i32) -> (i32, i32) {
    %c0_i32 = arith.constant 0 : i32
    %c0_i32_0 = arith.constant 0 : i32
    %c0_i32_1 = arith.constant 0 : i32
    return %c0_i32, %c0_i32_0 : i32, i32
  }
  func.func @transform_5(%arg0: i32) -> (i32, i32) {
    %c0_i32 = arith.constant 0 : i32
    %c0_i32_0 = arith.constant 0 : i32
    %c0_i32_1 = arith.constant 0 : i32
    return %c0_i32, %c0_i32_0 : i32, i32
  }
  func.func @transform_6(%arg0: i32) -> (i32, i32) {
    %c0_i32 = arith.constant 0 : i32
    %c0_i32_0 = arith.constant 0 : i32
    return %arg0, %c0_i32 : i32, i32
  }
  func.func @transform_7(%arg0: i32) -> (i32, i32) {
    %c0_i32 = arith.constant 0 : i32
    %c0_i32_0 = arith.constant 0 : i32
    return %arg0, %c0_i32 : i32, i32
  }
}

</mosaic_0001>

<llo_original>
// kernel: tpu_custom_call.1
$region0: #{tpu_custom_call.1}
  #allocation0 [shape = 'u32[]', space=smem, size = 0x4, offset = 0x4, fixed_abs, tag = 'smem constant byte address 0x4 - core index']
  #allocation1 [shape = 'u32[72,128]{1,0:T(1,128)}', space=vmem, size = 0x9000, scoped, tag = 'internal scratch']
  %s0 = inlined_call_operand.vmem [shape: f32[64,8,4], index: 0, kind: input, shape index: {}]
  %s1 = inlined_call_operand.vmem [shape: f32[64,1], index: 1, kind: input, shape index: {}]
  %s2 = inlined_call_operand.vmem [shape: bf16[4,32], index: 2, kind: input, shape index: {}]
  %s3 = inlined_call_operand.vmem [shape: f32[1,32], index: 3, kind: input, shape index: {}]
  %s4 = inlined_call_operand.vmem [shape: bf16[32,128], index: 4, kind: input, shape index: {}]
  %s5 = inlined_call_operand.vmem [shape: f32[1,128], index: 5, kind: input, shape index: {}]
  %s6 = inlined_call_operand.vmem [shape: f32[64,4], index: 6, kind: output, shape index: {0}]
  %s7 = inlined_call_operand.hbm [shape: bf16[64,128], index: 7, kind: output, shape index: {1}]
  %8 = xla_tuple %s6, %s7
  %s9 = sld [smem:[#allocation0]]
  $region65: #{tpu_custom_call.1} parent=0
    _
  %s11 = ssub.s32 1, %s9
  %s12 = scalar_select 0, %s11, %s9
  $region1: #{tpu_custom_call.1} parent=0
    #allocation2 [shape = 'u8[16384]{0}', space=vmem, size = 0x4000, scoped, tag = 'output window, operand 1']
    #allocation3 [shape = 's32[2]{0}', space=sflag, size = 0x8, scoped, tag = 'scoped memory for tpu_custom_call.1']
    %13 = vsyncpa [#allocation3], 0
    %s14 = scalar_lea.sflag [#allocation3], 1
    %15 = vsyncpa %s14, 0
    loop: start=0, step=1, limit=4
    $region2: #{tpu_custom_call.1} parent=1 // loop_pre_header
      _
    $region3: #{tpu_custom_call.1} parent=1 // loop_header
      %s17 = sphi 0, %s21
      %p18 = scmp.ge.s32.totalorder %s17, 4
      %s27 = sphi 0, %s29
      %s30 = sphi 0, %s27
      %s31 = sphi 0, %s30
      %s47 = sphi 0, %s31
      %s53 = sphi 0, %s55
      %s56 = sphi 0, %s53
      %s57 = sphi 0, %s56
      %s73 = sphi 0, %s57
      %s77 = sphi 0, %s77
      %s79 = sphi 0, %s77
      %s80 = sphi 0, %s79
      %s94 = sphi 0, %s80
      %s98 = sphi 0, %s98
      %s100 = sphi 0, %s98
      %s101 = sphi 0, %s100
      %s115 = sphi 0, %s101
      %s119 = sphi 0, %s119
      %s121 = sphi 0, %s119
      %s122 = sphi 0, %s121
      %s136 = sphi 0, %s122
      %s140 = sphi 0, %s140
      %s142 = sphi 0, %s140
      %s143 = sphi 0, %s142
      %s157 = sphi 0, %s143
      %s163 = sphi 0, %s165
      %s166 = sphi 0, %s163
      %s167 = sphi 0, %s166
      %s183 = sphi 0, %s167
      %s189 = sphi 0, %s191
      %s192 = sphi 0, %s189
      %s193 = sphi 0, %s192
      %s209 = sphi 0, %s193
    $region4: #{tpu_custom_call.1} parent=1 // loop_header_branch
      %20 = sbr.rel (%p18) target = $region8
    $region5: #{tpu_custom_call.1} parent=1 // loop_body
      %s22 = ssub.s32 %s17, 1
      %s23 = ssub.s32 %s17, 2
      %s24 = sadd.s32 %s17, 1
      %s25 = ssub.s32 %s17, %s24
      %p26 = scmp.eq.s32.totalorder %s25, 0
      %s28 = sadd.s32 %s27, 1
      %s29 = scalar_select %p26, %s27, %s28
      %p32 = pneg %p26
      %p33 = scmp.eq.s32.totalorder %s17, 1
      %p34 = por %p32, %p33
      %p35 = scmp.ne.s32.totalorder %s27, %s30
      %p36 = scmp.eq.s32.totalorder %s17, 0
      %p37 = por %p35, %p36
      %p38 = scmp.ne.s32.totalorder %s27, %s30
      %p39 = scmp.eq.s32.totalorder %s22, 1
      %p40 = por %p38, %p39
      %p41 = scmp.ne.s32.totalorder %s30, %s31
      %p42 = scmp.eq.s32.totalorder %s22, 0
      %p43 = por %p41, %p42
      %p44 = scmp.ne.s32.totalorder %s30, %s31
      %p45 = scmp.eq.s32.totalorder %s23, 1
      %p46 = por %p44, %p45
      %p48 = scmp.ne.s32.totalorder %s31, %s47
      %p49 = scmp.eq.s32.totalorder %s23, 0
      %p50 = por %p48, %p49
      %s51 = ssub.s32 %s17, %s24
      %p52 = scmp.eq.s32.totalorder %s51, 0
      %s54 = sadd.s32 %s53, 1
      %s55 = scalar_select %p52, %s53, %s54
      %p58 = pneg %p52
      %p59 = scmp.eq.s32.totalorder %s17, 1
      %p60 = por %p58, %p59
      %p61 = scmp.ne.s32.totalorder %s53, %s56
      %p62 = scmp.eq.s32.totalorder %s17, 0
      %p63 = por %p61, %p62
      %p64 = scmp.ne.s32.totalorder %s53, %s56
      %p65 = scmp.eq.s32.totalorder %s22, 1
      %p66 = por %p64, %p65
      %p67 = scmp.ne.s32.totalorder %s56, %s57
      %p68 = scmp.eq.s32.totalorder %s22, 0
      %p69 = por %p67, %p68
      %p70 = scmp.ne.s32.totalorder %s56, %s57
      %p71 = scmp.eq.s32.totalorder %s23, 1
      %p72 = por %p70, %p71
      %p74 = scmp.ne.s32.totalorder %s57, %s73
      %p75 = scmp.eq.s32.totalorder %s23, 0
      %p76 = por %p74, %p75
      %s78 = sadd.s32 %s77, 1
      %p81 = scmp.eq.s32.totalorder %s17, 1
      %p82 = scmp.ne.s32.totalorder %s77, %s79
      %p83 = scmp.eq.s32.totalorder %s17, 0
      %p84 = por %p82, %p83
      %p85 = scmp.ne.s32.totalorder %s77, %s79
      %p86 = scmp.eq.s32.totalorder %s22, 1
      %p87 = por %p85, %p86
      %p88 = scmp.ne.s32.totalorder %s79, %s80
      %p89 = scmp.eq.s32.totalorder %s22, 0
      %p90 = por %p88, %p89
      %p91 = scmp.ne.s32.totalorder %s79, %s80
      %p92 = scmp.eq.s32.totalorder %s23, 1
      %p93 = por %p91, %p92
      %p95 = scmp.ne.s32.totalorder %s80, %s94
      %p96 = scmp.eq.s32.totalorder %s23, 0
      %p97 = por %p95, %p96
      %s99 = sadd.s32 %s98, 1
      %p102 = scmp.eq.s32.totalorder %s17, 1
      %p103 = scmp.ne.s32.totalorder %s98, %s100
      %p104 = scmp.eq.s32.totalorder %s17, 0
      %p105 = por %p103, %p104
      %p106 = scmp.ne.s32.totalorder %s98, %s100
      %p107 = scmp.eq.s32.totalorder %s22, 1
      %p108 = por %p106, %p107
      %p109 = scmp.ne.s32.totalorder %s100, %s101
      %p110 = scmp.eq.s32.totalorder %s22, 0
      %p111 = por %p109, %p110
      %p112 = scmp.ne.s32.totalorder %s100, %s101
      %p113 = scmp.eq.s32.totalorder %s23, 1
      %p114 = por %p112, %p113
      %p116 = scmp.ne.s32.totalorder %s101, %s115
      %p117 = scmp.eq.s32.totalorder %s23, 0
      %p118 = por %p116, %p117
      %s120 = sadd.s32 %s119, 1
      %p123 = scmp.eq.s32.totalorder %s17, 1
      %p124 = scmp.ne.s32.totalorder %s119, %s121
      %p125 = scmp.eq.s32.totalorder %s17, 0
      %p126 = por %p124, %p125
      %p127 = scmp.ne.s32.totalorder %s119, %s121
      %p128 = scmp.eq.s32.totalorder %s22, 1
      %p129 = por %p127, %p128
      %p130 = scmp.ne.s32.totalorder %s121, %s122
      %p131 = scmp.eq.s32.totalorder %s22, 0
      %p132 = por %p130, %p131
      %p133 = scmp.ne.s32.totalorder %s121, %s122
      %p134 = scmp.eq.s32.totalorder %s23, 1
      %p135 = por %p133, %p134
      %p137 = scmp.ne.s32.totalorder %s122, %s136
      %p138 = scmp.eq.s32.totalorder %s23, 0
      %p139 = por %p137, %p138
      %s141 = sadd.s32 %s140, 1
      %p144 = scmp.eq.s32.totalorder %s17, 1
      %p145 = scmp.ne.s32.totalorder %s140, %s142
      %p146 = scmp.eq.s32.totalorder %s17, 0
      %p147 = por %p145, %p146
      %p148 = scmp.ne.s32.totalorder %s140, %s142
      %p149 = scmp.eq.s32.totalorder %s22, 1
      %p150 = por %p148, %p149
      %p151 = scmp.ne.s32.totalorder %s142, %s143
      %p152 = scmp.eq.s32.totalorder %s22, 0
      %p153 = por %p151, %p152
      %p154 = scmp.ne.s32.totalorder %s142, %s143
      %p155 = scmp.eq.s32.totalorder %s23, 1
      %p156 = por %p154, %p155
      %p158 = scmp.ne.s32.totalorder %s143, %s157
      %p159 = scmp.eq.s32.totalorder %s23, 0
      %p160 = por %p158, %p159
      %s161 = ssub.s32 %s17, %s24
      %p162 = scmp.eq.s32.totalorder %s161, 0
      %s164 = sadd.s32 %s163, 1
      %s165 = scalar_select %p162, %s163, %s164
      %p168 = pneg %p162
      %p169 = scmp.eq.s32.totalorder %s17, 1
      %p170 = por %p168, %p169
      %p171 = scmp.ne.s32.totalorder %s163, %s166
      %p172 = scmp.eq.s32.totalorder %s17, 0
      %p173 = por %p171, %p172
      %p174 = scmp.ne.s32.totalorder %s163, %s166
      %p175 = scmp.eq.s32.totalorder %s22, 1
      %p176 = por %p174, %p175
      %p177 = scmp.ne.s32.totalorder %s166, %s167
      %p178 = scmp.eq.s32.totalorder %s22, 0
      %p179 = por %p177, %p178
      %p180 = scmp.ne.s32.totalorder %s166, %s167
      %p181 = scmp.eq.s32.totalorder %s23, 1
      %p182 = por %p180, %p181
      %p184 = scmp.ne.s32.totalorder %s167, %s183
      %p185 = scmp.eq.s32.totalorder %s23, 0
      %p186 = por %p184, %p185
      %s187 = ssub.s32 %s17, %s24
      %p188 = scmp.eq.s32.totalorder %s187, 0
      %s190 = sadd.s32 %s189, 1
      %s191 = scalar_select %p188, %s189, %s190
      %p194 = pneg %p188
      %p195 = scmp.eq.s32.totalorder %s17, 1
      %p196 = por %p194, %p195
      %p197 = scmp.ne.s32.totalorder %s189, %s192
      %p198 = scmp.eq.s32.totalorder %s17, 0
      %p199 = por %p197, %p198
      %p200 = scmp.ne.s32.totalorder %s189, %s192
      %p201 = scmp.eq.s32.totalorder %s22, 1
      %p202 = por %p200, %p201
      %p203 = scmp.ne.s32.totalorder %s192, %s193
      %p204 = scmp.eq.s32.totalorder %s22, 0
      %p205 = por %p203, %p204
      %p206 = scmp.ne.s32.totalorder %s192, %s193
      %p207 = scmp.eq.s32.totalorder %s23, 1
      %p208 = por %p206, %p207
      %p210 = scmp.ne.s32.totalorder %s193, %s209
      %p211 = scmp.eq.s32.totalorder %s23, 0
      %p212 = por %p210, %p211
      %p213 = scmp.le.s32.totalorder 1, %s17
      %p214 = scmp.lt.s32.totalorder %s17, 3
      %p215 = pnand %p213, %p214
      %p216 = pneg %p215
      // Predicated region
      $region9: #{tpu_custom_call.1} parent=5 // pred_check
        _
      $region10: #{tpu_custom_call.1} parent=5 // pred_check_branch
        %218 = sbr.rel (%p215) target = $region12
      $region11: #{tpu_custom_call.1} parent=5 // pred_region
        %s219 = ssub.s32 %s17, 1
        // Predicated region
        $region13: #{tpu_custom_call.1} parent=11 // pred_check
          %p220 = pneg %p90
        $region14: #{tpu_custom_call.1} parent=11 // pred_check_branch
          %222 = sbr.rel (%p220) target = $region16
        $region15: #{tpu_custom_call.1} parent=11 // pred_region
          _
        $region16: #{tpu_custom_call.1} parent=11 // pred_fallthru
          _
        // Predicated region
        $region17: #{tpu_custom_call.1} parent=11 // pred_check
          %p223 = pneg %p111
        $region18: #{tpu_custom_call.1} parent=11 // pred_check_branch
          %225 = sbr.rel (%p223) target = $region20
        $region19: #{tpu_custom_call.1} parent=11 // pred_region
          _
        $region20: #{tpu_custom_call.1} parent=11 // pred_fallthru
          _
        // Predicated region
        $region21: #{tpu_custom_call.1} parent=11 // pred_check
          %p226 = pneg %p132
        $region22: #{tpu_custom_call.1} parent=11 // pred_check_branch
          %228 = sbr.rel (%p226) target = $region24
        $region23: #{tpu_custom_call.1} parent=11 // pred_region
          _
        $region24: #{tpu_custom_call.1} parent=11 // pred_fallthru
          _
        // Predicated region
        $region25: #{tpu_custom_call.1} parent=11 // pred_check
          %p229 = pneg %p153
        $region26: #{tpu_custom_call.1} parent=11 // pred_check_branch
          %231 = sbr.rel (%p229) target = $region28
        $region27: #{tpu_custom_call.1} parent=11 // pred_region
          _
        $region28: #{tpu_custom_call.1} parent=11 // pred_fallthru
          _
      $region12: #{tpu_custom_call.1} parent=5 // pred_fallthru
        _
      %p232 = scmp.lt.s32.totalorder %s17, 2
      // Predicated region
      $region29: #{tpu_custom_call.1} parent=5 // pred_check
        %p233 = pneg %p232
      $region30: #{tpu_custom_call.1} parent=5 // pred_check_branch
        %235 = sbr.rel (%p233) target = $region32
      $region31: #{tpu_custom_call.1} parent=5 // pred_region
        // Predicated region
        $region33: #{tpu_custom_call.1} parent=31 // pred_check
          %p236 = pneg %p37
        $region34: #{tpu_custom_call.1} parent=31 // pred_check_branch
          %238 = sbr.rel (%p236) target = $region36
        $region35: #{tpu_custom_call.1} parent=31 // pred_region
          %s239 = smul.u32 32, %s17
          %p240 = scmp.lt.s32.totalorder %s239, 63
          %s241 = scalar_select %p240, %s239, 63
          %s242 = smul.addr %s241, 8
          %s243 = scalar_lea.vmem %s0, %s242
          %s244 = smul.u32 32, %s17
        $region36: #{tpu_custom_call.1} parent=31 // pred_fallthru
          _
        // Predicated region
        $region37: #{tpu_custom_call.1} parent=31 // pred_check
          %p245 = pneg %p63
        $region38: #{tpu_custom_call.1} parent=31 // pred_check_branch
          %247 = sbr.rel (%p245) target = $region40
        $region39: #{tpu_custom_call.1} parent=31 // pred_region
          %s248 = smul.u32 4, %s17
          %p249 = scmp.lt.s32.totalorder %s248, 7
          %s250 = scalar_select %p249, %s248, 7
          %s251 = smul.addr %s250, 8
          %s252 = scalar_lea.vmem %s1, %s251
          %s253 = smul.u32 4, %s17
        $region40: #{tpu_custom_call.1} parent=31 // pred_fallthru
          _
      $region32: #{tpu_custom_call.1} parent=5 // pred_fallthru
        _
      %p254 = scmp.le.s32.totalorder 1, %s17
      %p255 = scmp.lt.s32.totalorder %s17, 3
      %p256 = pnand %p254, %p255
      %p257 = pneg %p256
      // Predicated region
      $region41: #{tpu_custom_call.1} parent=5 // pred_check
        _
      $region42: #{tpu_custom_call.1} parent=5 // pred_check_branch
        %259 = sbr.rel (%p256) target = $region44
      $region43: #{tpu_custom_call.1} parent=5 // pred_region
        %s260 = ssub.s32 %s17, 1
        %s261 = smul.u32 32, %s22
        %p262 = scmp.lt.s32.totalorder %s261, 63
        %s263 = scalar_select %p262, %s261, 63
        %s264 = smul.addr %s263, 8
        %s265 = scalar_lea.vmem %s0, %s264
        %p266 = pneg %p43
        %p267 = pneg %p40
        %s268 = smul.u32 4, %s22
        %p269 = scmp.lt.s32.totalorder %s268, 7
        %s270 = scalar_select %p269, %s268, 7
        %s271 = smul.addr %s270, 8
        %s272 = scalar_lea.vmem %s1, %s271
        %p273 = pneg %p69
        %p274 = pneg %p66
        %p275 = pneg %p90
        %p276 = pneg %p87
        %p277 = pneg %p111
        %p278 = pneg %p108
        %p279 = pneg %p132
        %p280 = pneg %p129
        %p281 = pneg %p153
        %p282 = pneg %p150
        %p283 = pneg %p179
        %p284 = pneg %p176
        %s285 = smul.u32 4, %s22
        %p286 = scmp.lt.s32.totalorder %s285, 7
        %s287 = scalar_select %p286, %s285, 7
        %s288 = smul.addr %s287, 8
        %s289 = scalar_lea.vmem %s6, %s288
        %p290 = pneg %p205
        %p291 = pneg %p202
        %s292 = sand.u32 %s192, 1
        %s293 = scalar_lea.sflag [#allocation3], %s292
        %s294 = sand.u32 %s192, 1
        %s295 = smul.addr %s294, 16
        %s296 = scalar_lea.vmem [#allocation2], %s295
        %s297 = smul.u32 32, %s22
        %p298 = scmp.lt.s32.totalorder %s297, 63
        %s299 = scalar_select %p298, %s297, 63
        %s300 = smul.addr %s299, 8
        %s301 = scalar_lea.vmem %s0, %s300
        %s302 = smul.u32 32, %s22
        %s303 = smul.u32 4, %s22
        %p304 = scmp.lt.s32.totalorder %s303, 7
        %s305 = scalar_select %p304, %s303, 7
        %s306 = smul.addr %s305, 8
        %s307 = scalar_lea.vmem %s1, %s306
        %s308 = smul.u32 4, %s22
        %s309 = smul.u32 4, %s22
        %p310 = scmp.lt.s32.totalorder %s309, 7
        %s311 = scalar_select %p310, %s309, 7
        %s312 = smul.addr %s311, 8
        %s313 = scalar_lea.vmem %s6, %s312
        %s314 = smul.u32 4, %s22
        %s315 = smul.u32 4, %s22
        %v317 = vld [vmem:[%s307] sm:$0xff]
        %v318 = vld [vmem:[%s307 + $0x8] sm:$0xff]
        %v319 = vld [vmem:[%s307 + $0x10] sm:$0xff]
        %v320 = vld [vmem:[%s307 + $0x18] sm:$0xff]
        %v321 = vld [vmem:[%s301] sm:$0x1]
        %v322 = vld [vmem:[%s301 + $0x8] sm:$0x1]
        %v323 = vld [vmem:[%s301 + $0x10] sm:$0x1]
        %v324 = vld [vmem:[%s301 + $0x18] sm:$0x1]
        %v325 = vld [vmem:[%s301 + $0x20] sm:$0x1]
        %v326 = vld [vmem:[%s301 + $0x28] sm:$0x1]
        %v327 = vld [vmem:[%s301 + $0x30] sm:$0x1]
        %v328 = vld [vmem:[%s301 + $0x38] sm:$0x1]
        %v329 = vld [vmem:[%s301 + $0x40] sm:$0x1]
        %v330 = vld [vmem:[%s301 + $0x48] sm:$0x1]
        %v331 = vld [vmem:[%s301 + $0x50] sm:$0x1]
        %v332 = vld [vmem:[%s301 + $0x58] sm:$0x1]
        %v333 = vld [vmem:[%s301 + $0x60] sm:$0x1]
        %v334 = vld [vmem:[%s301 + $0x68] sm:$0x1]
        %v335 = vld [vmem:[%s301 + $0x70] sm:$0x1]
        %v336 = vld [vmem:[%s301 + $0x78] sm:$0x1]
        %v337 = vld [vmem:[%s301 + $0x80] sm:$0x1]
        %v338 = vld [vmem:[%s301 + $0x88] sm:$0x1]
        %v339 = vld [vmem:[%s301 + $0x90] sm:$0x1]
        %v340 = vld [vmem:[%s301 + $0x98] sm:$0x1]
        %v341 = vld [vmem:[%s301 + $0xa0] sm:$0x1]
        %v342 = vld [vmem:[%s301 + $0xa8] sm:$0x1]
        %v343 = vld [vmem:[%s301 + $0xb0] sm:$0x1]
        %v344 = vld [vmem:[%s301 + $0xb8] sm:$0x1]
        %v345 = vld [vmem:[%s301 + $0xc0] sm:$0x1]
        %v346 = vld [vmem:[%s301 + $0xc8] sm:$0x1]
        %v347 = vld [vmem:[%s301 + $0xd0] sm:$0x1]
        %v348 = vld [vmem:[%s301 + $0xd8] sm:$0x1]
        %v349 = vld [vmem:[%s301 + $0xe0] sm:$0x1]
        %v350 = vld [vmem:[%s301 + $0xe8] sm:$0x1]
        %v351 = vld [vmem:[%s301 + $0xf0] sm:$0x1]
        %v352 = vld [vmem:[%s301 + $0xf8] sm:$0x1]
        %vm353 = vcmp.lt.f32.partialorder 0.0, %v317
        %vm354 = vcmp.lt.f32.partialorder 0.0, %v318
        %vm355 = vcmp.lt.f32.partialorder 0.0, %v319
        %vm356 = vcmp.lt.f32.partialorder 0.0, %v320
        %v357 = vsel %vm353, 1, 0
        %v358 = vsel %vm354, 1, 0
        %v359 = vsel %vm355, 1, 0
        %v360 = vsel %vm356, 1, 0
        %361 = vset.pattern.permute.xlu0 0
        %362 = vperm.xlu0 %361, %v357
        %v363 = vpop.permute.xlu0 %362
        %364 = vset.pattern.permute.xlu0 0
        %365 = vperm.xlu0 %364, %v358
        %v366 = vpop.permute.xlu0 %365
        %367 = vset.pattern.permute.xlu0 0
        %368 = vperm.xlu0 %367, %v359
        %v369 = vpop.permute.xlu0 %368
        %370 = vset.pattern.permute.xlu0 0
        %371 = vperm.xlu0 %370, %v360
        %v372 = vpop.permute.xlu0 %371
        %vm373 = vcmp.eq.s32.totalorder %v363, 1
        %vm374 = vcmp.eq.s32.totalorder %v366, 1
        %vm375 = vcmp.eq.s32.totalorder %v369, 1
        %vm376 = vcmp.eq.s32.totalorder %v372, 1
        %v409 = vrot.slane %v322, 7
        %vm410 = vcmask 1041409
        %v411 = vsel %vm410, %v409, %v321
        %v412 = vrot.slane %v323, 6
        %vm413 = vcmask 1042434
        %v414 = vsel %vm413, %v412, %v411
        %v415 = vrot.slane %v324, 5
        %vm416 = vcmask 1043459
        %v417 = vsel %vm416, %v415, %v414
        %v418 = vrot.slane %v325, 4
        %vm419 = vcmask 1044484
        %v420 = vsel %vm419, %v418, %v417
        %v421 = vrot.slane %v326, 3
        %vm422 = vcmask 1045509
        %v423 = vsel %vm422, %v421, %v420
        %v424 = vrot.slane %v327, 2
        %vm425 = vcmask 1046534
        %v426 = vsel %vm425, %v424, %v423
        %v427 = vrot.slane %v328, 1
        %vm428 = vcmask 1047559
        %v429 = vsel %vm428, %v427, %v426
        %v430 = vrot.slane %v330, 7
        %v431 = vsel %vm410, %v430, %v329
        %v432 = vrot.slane %v331, 6
        %v433 = vsel %vm413, %v432, %v431
        %v434 = vrot.slane %v332, 5
        %v435 = vsel %vm416, %v434, %v433
        %v436 = vrot.slane %v333, 4
        %v437 = vsel %vm419, %v436, %v435
        %v438 = vrot.slane %v334, 3
        %v439 = vsel %vm422, %v438, %v437
        %v440 = vrot.slane %v335, 2
        %v441 = vsel %vm425, %v440, %v439
        %v442 = vrot.slane %v336, 1
        %v443 = vsel %vm428, %v442, %v441
        %v444 = vrot.slane %v338, 7
        %v445 = vsel %vm410, %v444, %v337
        %v446 = vrot.slane %v339, 6
        %v447 = vsel %vm413, %v446, %v445
        %v448 = vrot.slane %v340, 5
        %v449 = vsel %vm416, %v448, %v447
        %v450 = vrot.slane %v341, 4
        %v451 = vsel %vm419, %v450, %v449
        %v452 = vrot.slane %v342, 3
        %v453 = vsel %vm422, %v452, %v451
        %v454 = vrot.slane %v343, 2
        %v455 = vsel %vm425, %v454, %v453
        %v456 = vrot.slane %v344, 1
        %v457 = vsel %vm428, %v456, %v455
        %v458 = vrot.slane %v346, 7
        %v459 = vsel %vm410, %v458, %v345
        %v460 = vrot.slane %v347, 6
        %v461 = vsel %vm413, %v460, %v459
        %v462 = vrot.slane %v348, 5
        %v463 = vsel %vm416, %v462, %v461
        %v464 = vrot.slane %v349, 4
        %v465 = vsel %vm419, %v464, %v463
        %v466 = vrot.slane %v350, 3
        %v467 = vsel %vm422, %v466, %v465
        %v468 = vrot.slane %v351, 2
        %v469 = vsel %vm425, %v468, %v467
        %v470 = vrot.slane %v352, 1
        %v471 = vsel %vm428, %v470, %v469
        %v476 = vsel %vm373, %v429, 0.0
        %v477 = vsel %vm374, %v443, 0.0
        %v478 = vsel %vm375, %v457, 0.0
        %v479 = vsel %vm376, %v471, 0.0
        %v480 = vadd.f32 %v476, 0.0
        %v481 = vadd.f32 %v477, 0.0
        %v482 = vadd.f32 %v478, 0.0
        %v483 = vadd.f32 %v479, 0.0
        %v484 = vld [vmem:[%s301 + $0x1] sm:$0x1]
        %v485 = vld [vmem:[%s301 + $0x9] sm:$0x1]
        %v486 = vld [vmem:[%s301 + $0x11] sm:$0x1]
        %v487 = vld [vmem:[%s301 + $0x19] sm:$0x1]
        %v488 = vld [vmem:[%s301 + $0x21] sm:$0x1]
        %v489 = vld [vmem:[%s301 + $0x29] sm:$0x1]
        %v490 = vld [vmem:[%s301 + $0x31] sm:$0x1]
        %v491 = vld [vmem:[%s301 + $0x39] sm:$0x1]
        %v492 = vld [vmem:[%s301 + $0x41] sm:$0x1]
        %v493 = vld [vmem:[%s301 + $0x49] sm:$0x1]
        %v494 = vld [vmem:[%s301 + $0x51] sm:$0x1]
        %v495 = vld [vmem:[%s301 + $0x59] sm:$0x1]
        %v496 = vld [vmem:[%s301 + $0x61] sm:$0x1]
        %v497 = vld [vmem:[%s301 + $0x69] sm:$0x1]
        %v498 = vld [vmem:[%s301 + $0x71] sm:$0x1]
        %v499 = vld [vmem:[%s301 + $0x79] sm:$0x1]
        %v500 = vld [vmem:[%s301 + $0x81] sm:$0x1]
        %v501 = vld [vmem:[%s301 + $0x89] sm:$0x1]
        %v502 = vld [vmem:[%s301 + $0x91] sm:$0x1]
        %v503 = vld [vmem:[%s301 + $0x99] sm:$0x1]
        %v504 = vld [vmem:[%s301 + $0xa1] sm:$0x1]
        %v505 = vld [vmem:[%s301 + $0xa9] sm:$0x1]
        %v506 = vld [vmem:[%s301 + $0xb1] sm:$0x1]
        %v507 = vld [vmem:[%s301 + $0xb9] sm:$0x1]
        %v508 = vld [vmem:[%s301 + $0xc1] sm:$0x1]
        %v509 = vld [vmem:[%s301 + $0xc9] sm:$0x1]
        %v510 = vld [vmem:[%s301 + $0xd1] sm:$0x1]
        %v511 = vld [vmem:[%s301 + $0xd9] sm:$0x1]
        %v512 = vld [vmem:[%s301 + $0xe1] sm:$0x1]
        %v513 = vld [vmem:[%s301 + $0xe9] sm:$0x1]
        %v514 = vld [vmem:[%s301 + $0xf1] sm:$0x1]
        %v515 = vld [vmem:[%s301 + $0xf9] sm:$0x1]
        %vm516 = vcmp.lt.f32.partialorder 1.0, %v317
        %vm517 = vcmp.lt.f32.partialorder 1.0, %v318
        %vm518 = vcmp.lt.f32.partialorder 1.0, %v319
        %vm519 = vcmp.lt.f32.partialorder 1.0, %v320
        %v520 = vsel %vm516, 1, 0
        %v521 = vsel %vm517, 1, 0
        %v522 = vsel %vm518, 1, 0
        %v523 = vsel %vm519, 1, 0
        %524 = vset.pattern.permute.xlu0 0
        %525 = vperm.xlu0 %524, %v520
        %v526 = vpop.permute.xlu0 %525
        %527 = vset.pattern.permute.xlu0 0
        %528 = vperm.xlu0 %527, %v521
        %v529 = vpop.permute.xlu0 %528
        %530 = vset.pattern.permute.xlu0 0
        %531 = vperm.xlu0 %530, %v522
        %v532 = vpop.permute.xlu0 %531
        %533 = vset.pattern.permute.xlu0 0
        %534 = vperm.xlu0 %533, %v523
        %v535 = vpop.permute.xlu0 %534
        %vm536 = vcmp.eq.s32.totalorder %v526, 1
        %vm537 = vcmp.eq.s32.totalorder %v529, 1
        %vm538 = vcmp.eq.s32.totalorder %v532, 1
        %vm539 = vcmp.eq.s32.totalorder %v535, 1
        %v572 = vrot.slane %v485, 7
        %v573 = vsel %vm410, %v572, %v484
        %v574 = vrot.slane %v486, 6
        %v575 = vsel %vm413, %v574, %v573
        %v576 = vrot.slane %v487, 5
        %v577 = vsel %vm416, %v576, %v575
        %v578 = vrot.slane %v488, 4
        %v579 = vsel %vm419, %v578, %v577
        %v580 = vrot.slane %v489, 3
        %v581 = vsel %vm422, %v580, %v579
        %v582 = vrot.slane %v490, 2
        %v583 = vsel %vm425, %v582, %v581
        %v584 = vrot.slane %v491, 1
        %v585 = vsel %vm428, %v584, %v583
        %v586 = vrot.slane %v493, 7
        %v587 = vsel %vm410, %v586, %v492
        %v588 = vrot.slane %v494, 6
        %v589 = vsel %vm413, %v588, %v587
        %v590 = vrot.slane %v495, 5
        %v591 = vsel %vm416, %v590, %v589
        %v592 = vrot.slane %v496, 4
        %v593 = vsel %vm419, %v592, %v591
        %v594 = vrot.slane %v497, 3
        %v595 = vsel %vm422, %v594, %v593
        %v596 = vrot.slane %v498, 2
        %v597 = vsel %vm425, %v596, %v595
        %v598 = vrot.slane %v499, 1
        %v599 = vsel %vm428, %v598, %v597
        %v600 = vrot.slane %v501, 7
        %v601 = vsel %vm410, %v600, %v500
        %v602 = vrot.slane %v502, 6
        %v603 = vsel %vm413, %v602, %v601
        %v604 = vrot.slane %v503, 5
        %v605 = vsel %vm416, %v604, %v603
        %v606 = vrot.slane %v504, 4
        %v607 = vsel %vm419, %v606, %v605
        %v608 = vrot.slane %v505, 3
        %v609 = vsel %vm422, %v608, %v607
        %v610 = vrot.slane %v506, 2
        %v611 = vsel %vm425, %v610, %v609
        %v612 = vrot.slane %v507, 1
        %v613 = vsel %vm428, %v612, %v611
        %v614 = vrot.slane %v509, 7
        %v615 = vsel %vm410, %v614, %v508
        %v616 = vrot.slane %v510, 6
        %v617 = vsel %vm413, %v616, %v615
        %v618 = vrot.slane %v511, 5
        %v619 = vsel %vm416, %v618, %v617
        %v620 = vrot.slane %v512, 4
        %v621 = vsel %vm419, %v620, %v619
        %v622 = vrot.slane %v513, 3
        %v623 = vsel %vm422, %v622, %v621
        %v624 = vrot.slane %v514, 2
        %v625 = vsel %vm425, %v624, %v623
        %v626 = vrot.slane %v515, 1
        %v627 = vsel %vm428, %v626, %v625
        %v632 = vsel %vm536, %v585, 0.0
        %v633 = vsel %vm537, %v599, 0.0
        %v634 = vsel %vm538, %v613, 0.0
        %v635 = vsel %vm539, %v627, 0.0
        %v636 = vadd.f32 %v480, %v632
        %v637 = vadd.f32 %v481, %v633
        %v638 = vadd.f32 %v482, %v634
        %v639 = vadd.f32 %v483, %v635
        %v640 = vld [vmem:[%s301 + $0x2] sm:$0x1]
        %v641 = vld [vmem:[%s301 + $0xa] sm:$0x1]
        %v642 = vld [vmem:[%s301 + $0x12] sm:$0x1]
        %v643 = vld [vmem:[%s301 + $0x1a] sm:$0x1]
        %v644 = vld [vmem:[%s301 + $0x22] sm:$0x1]
        %v645 = vld [vmem:[%s301 + $0x2a] sm:$0x1]
        %v646 = vld [vmem:[%s301 + $0x32] sm:$0x1]
        %v647 = vld [vmem:[%s301 + $0x3a] sm:$0x1]
        %v648 = vld [vmem:[%s301 + $0x42] sm:$0x1]
        %v649 = vld [vmem:[%s301 + $0x4a] sm:$0x1]
        %v650 = vld [vmem:[%s301 + $0x52] sm:$0x1]
        %v651 = vld [vmem:[%s301 + $0x5a] sm:$0x1]
        %v652 = vld [vmem:[%s301 + $0x62] sm:$0x1]
        %v653 = vld [vmem:[%s301 + $0x6a] sm:$0x1]
        %v654 = vld [vmem:[%s301 + $0x72] sm:$0x1]
        %v655 = vld [vmem:[%s301 + $0x7a] sm:$0x1]
        %v656 = vld [vmem:[%s301 + $0x82] sm:$0x1]
        %v657 = vld [vmem:[%s301 + $0x8a] sm:$0x1]
        %v658 = vld [vmem:[%s301 + $0x92] sm:$0x1]
        %v659 = vld [vmem:[%s301 + $0x9a] sm:$0x1]
        %v660 = vld [vmem:[%s301 + $0xa2] sm:$0x1]
        %v661 = vld [vmem:[%s301 + $0xaa] sm:$0x1]
        %v662 = vld [vmem:[%s301 + $0xb2] sm:$0x1]
        %v663 = vld [vmem:[%s301 + $0xba] sm:$0x1]
        %v664 = vld [vmem:[%s301 + $0xc2] sm:$0x1]
        %v665 = vld [vmem:[%s301 + $0xca] sm:$0x1]
        %v666 = vld [vmem:[%s301 + $0xd2] sm:$0x1]
        %v667 = vld [vmem:[%s301 + $0xda] sm:$0x1]
        %v668 = vld [vmem:[%s301 + $0xe2] sm:$0x1]
        %v669 = vld [vmem:[%s301 + $0xea] sm:$0x1]
        %v670 = vld [vmem:[%s301 + $0xf2] sm:$0x1]
        %v671 = vld [vmem:[%s301 + $0xfa] sm:$0x1]
        %vm672 = vcmp.lt.f32.partialorder 2.0, %v317
        %vm673 = vcmp.lt.f32.partialorder 2.0, %v318
        %vm674 = vcmp.lt.f32.partialorder 2.0, %v319
        %vm675 = vcmp.lt.f32.partialorder 2.0, %v320
        %v676 = vsel %vm672, 1, 0
        %v677 = vsel %vm673, 1, 0
        %v678 = vsel %vm674, 1, 0
        %v679 = vsel %vm675, 1, 0
        %680 = vset.pattern.permute.xlu0 0
        %681 = vperm.xlu0 %680, %v676
        %v682 = vpop.permute.xlu0 %681
        %683 = vset.pattern.permute.xlu0 0
        %684 = vperm.xlu0 %683, %v677
        %v685 = vpop.permute.xlu0 %684
        %686 = vset.pattern.permute.xlu0 0
        %687 = vperm.xlu0 %686, %v678
        %v688 = vpop.permute.xlu0 %687
        %689 = vset.pattern.permute.xlu0 0
        %690 = vperm.xlu0 %689, %v679
        %v691 = vpop.permute.xlu0 %690
        %vm692 = vcmp.eq.s32.totalorder %v682, 1
        %vm693 = vcmp.eq.s32.totalorder %v685, 1
        %vm694 = vcmp.eq.s32.totalorder %v688, 1
        %vm695 = vcmp.eq.s32.totalorder %v691, 1
        %v728 = vrot.slane %v641, 7
        %v729 = vsel %vm410, %v728, %v640
        %v730 = vrot.slane %v642, 6
        %v731 = vsel %vm413, %v730, %v729
        %v732 = vrot.slane %v643, 5
        %v733 = vsel %vm416, %v732, %v731
        %v734 = vrot.slane %v644, 4
        %v735 = vsel %vm419, %v734, %v733
        %v736 = vrot.slane %v645, 3
        %v737 = vsel %vm422, %v736, %v735
        %v738 = vrot.slane %v646, 2
        %v739 = vsel %vm425, %v738, %v737
        %v740 = vrot.slane %v647, 1
        %v741 = vsel %vm428, %v740, %v739
        %v742 = vrot.slane %v649, 7
        %v743 = vsel %vm410, %v742, %v648
        %v744 = vrot.slane %v650, 6
        %v745 = vsel %vm413, %v744, %v743
        %v746 = vrot.slane %v651, 5
        %v747 = vsel %vm416, %v746, %v745
        %v748 = vrot.slane %v652, 4
        %v749 = vsel %vm419, %v748, %v747
        %v750 = vrot.slane %v653, 3
        %v751 = vsel %vm422, %v750, %v749
        %v752 = vrot.slane %v654, 2
        %v753 = vsel %vm425, %v752, %v751
        %v754 = vrot.slane %v655, 1
        %v755 = vsel %vm428, %v754, %v753
        %v756 = vrot.slane %v657, 7
        %v757 = vsel %vm410, %v756, %v656
        %v758 = vrot.slane %v658, 6
        %v759 = vsel %vm413, %v758, %v757
        %v760 = vrot.slane %v659, 5
        %v761 = vsel %vm416, %v760, %v759
        %v762 = vrot.slane %v660, 4
        %v763 = vsel %vm419, %v762, %v761
        %v764 = vrot.slane %v661, 3
        %v765 = vsel %vm422, %v764, %v763
        %v766 = vrot.slane %v662, 2
        %v767 = vsel %vm425, %v766, %v765
        %v768 = vrot.slane %v663, 1
        %v769 = vsel %vm428, %v768, %v767
        %v770 = vrot.slane %v665, 7
        %v771 = vsel %vm410, %v770, %v664
        %v772 = vrot.slane %v666, 6
        %v773 = vsel %vm413, %v772, %v771
        %v774 = vrot.slane %v667, 5
        %v775 = vsel %vm416, %v774, %v773
        %v776 = vrot.slane %v668, 4
        %v777 = vsel %vm419, %v776, %v775
        %v778 = vrot.slane %v669, 3
        %v779 = vsel %vm422, %v778, %v777
        %v780 = vrot.slane %v670, 2
        %v781 = vsel %vm425, %v780, %v779
        %v782 = vrot.slane %v671, 1
        %v783 = vsel %vm428, %v782, %v781
        %v788 = vsel %vm692, %v741, 0.0
        %v789 = vsel %vm693, %v755, 0.0
        %v790 = vsel %vm694, %v769, 0.0
        %v791 = vsel %vm695, %v783, 0.0
        %v792 = vadd.f32 %v636, %v788
        %v793 = vadd.f32 %v637, %v789
        %v794 = vadd.f32 %v638, %v790
        %v795 = vadd.f32 %v639, %v791
        %v796 = vld [vmem:[%s301 + $0x3] sm:$0x1]
        %v797 = vld [vmem:[%s301 + $0xb] sm:$0x1]
        %v798 = vld [vmem:[%s301 + $0x13] sm:$0x1]
        %v799 = vld [vmem:[%s301 + $0x1b] sm:$0x1]
        %v800 = vld [vmem:[%s301 + $0x23] sm:$0x1]
        %v801 = vld [vmem:[%s301 + $0x2b] sm:$0x1]
        %v802 = vld [vmem:[%s301 + $0x33] sm:$0x1]
        %v803 = vld [vmem:[%s301 + $0x3b] sm:$0x1]
        %v804 = vld [vmem:[%s301 + $0x43] sm:$0x1]
        %v805 = vld [vmem:[%s301 + $0x4b] sm:$0x1]
        %v806 = vld [vmem:[%s301 + $0x53] sm:$0x1]
        %v807 = vld [vmem:[%s301 + $0x5b] sm:$0x1]
        %v808 = vld [vmem:[%s301 + $0x63] sm:$0x1]
        %v809 = vld [vmem:[%s301 + $0x6b] sm:$0x1]
        %v810 = vld [vmem:[%s301 + $0x73] sm:$0x1]
        %v811 = vld [vmem:[%s301 + $0x7b] sm:$0x1]
        %v812 = vld [vmem:[%s301 + $0x83] sm:$0x1]
        %v813 = vld [vmem:[%s301 + $0x8b] sm:$0x1]
        %v814 = vld [vmem:[%s301 + $0x93] sm:$0x1]
        %v815 = vld [vmem:[%s301 + $0x9b] sm:$0x1]
        %v816 = vld [vmem:[%s301 + $0xa3] sm:$0x1]
        %v817 = vld [vmem:[%s301 + $0xab] sm:$0x1]
        %v818 = vld [vmem:[%s301 + $0xb3] sm:$0x1]
        %v819 = vld [vmem:[%s301 + $0xbb] sm:$0x1]
        %v820 = vld [vmem:[%s301 + $0xc3] sm:$0x1]
        %v821 = vld [vmem:[%s301 + $0xcb] sm:$0x1]
        %v822 = vld [vmem:[%s301 + $0xd3] sm:$0x1]
        %v823 = vld [vmem:[%s301 + $0xdb] sm:$0x1]
        %v824 = vld [vmem:[%s301 + $0xe3] sm:$0x1]
        %v825 = vld [vmem:[%s301 + $0xeb] sm:$0x1]
        %v826 = vld [vmem:[%s301 + $0xf3] sm:$0x1]
        %v827 = vld [vmem:[%s301 + $0xfb] sm:$0x1]
        %vm828 = vcmp.lt.f32.partialorder 3.0, %v317
        %vm829 = vcmp.lt.f32.partialorder 3.0, %v318
        %vm830 = vcmp.lt.f32.partialorder 3.0, %v319
        %vm831 = vcmp.lt.f32.partialorder 3.0, %v320
        %v832 = vsel %vm828, 1, 0
        %v833 = vsel %vm829, 1, 0
        %v834 = vsel %vm830, 1, 0
        %v835 = vsel %vm831, 1, 0
        %836 = vset.pattern.permute.xlu0 0
        %837 = vperm.xlu0 %836, %v832
        %v838 = vpop.permute.xlu0 %837
        %839 = vset.pattern.permute.xlu0 0
        %840 = vperm.xlu0 %839, %v833
        %v841 = vpop.permute.xlu0 %840
        %842 = vset.pattern.permute.xlu0 0
        %843 = vperm.xlu0 %842, %v834
        %v844 = vpop.permute.xlu0 %843
        %845 = vset.pattern.permute.xlu0 0
        %846 = vperm.xlu0 %845, %v835
        %v847 = vpop.permute.xlu0 %846
        %vm848 = vcmp.eq.s32.totalorder %v838, 1
        %vm849 = vcmp.eq.s32.totalorder %v841, 1
        %vm850 = vcmp.eq.s32.totalorder %v844, 1
        %vm851 = vcmp.eq.s32.totalorder %v847, 1
        %v884 = vrot.slane %v797, 7
        %v885 = vsel %vm410, %v884, %v796
        %v886 = vrot.slane %v798, 6
        %v887 = vsel %vm413, %v886, %v885
        %v888 = vrot.slane %v799, 5
        %v889 = vsel %vm416, %v888, %v887
        %v890 = vrot.slane %v800, 4
        %v891 = vsel %vm419, %v890, %v889
        %v892 = vrot.slane %v801, 3
        %v893 = vsel %vm422, %v892, %v891
        %v894 = vrot.slane %v802, 2
        %v895 = vsel %vm425, %v894, %v893
        %v896 = vrot.slane %v803, 1
        %v897 = vsel %vm428, %v896, %v895
        %v898 = vrot.slane %v805, 7
        %v899 = vsel %vm410, %v898, %v804
        %v900 = vrot.slane %v806, 6
        %v901 = vsel %vm413, %v900, %v899
        %v902 = vrot.slane %v807, 5
        %v903 = vsel %vm416, %v902, %v901
        %v904 = vrot.slane %v808, 4
        %v905 = vsel %vm419, %v904, %v903
        %v906 = vrot.slane %v809, 3
        %v907 = vsel %vm422, %v906, %v905
        %v908 = vrot.slane %v810, 2
        %v909 = vsel %vm425, %v908, %v907
        %v910 = vrot.slane %v811, 1
        %v911 = vsel %vm428, %v910, %v909
        %v912 = vrot.slane %v813, 7
        %v913 = vsel %vm410, %v912, %v812
        %v914 = vrot.slane %v814, 6
        %v915 = vsel %vm413, %v914, %v913
        %v916 = vrot.slane %v815, 5
        %v917 = vsel %vm416, %v916, %v915
        %v918 = vrot.slane %v816, 4
        %v919 = vsel %vm419, %v918, %v917
        %v920 = vrot.slane %v817, 3
        %v921 = vsel %vm422, %v920, %v919
        %v922 = vrot.slane %v818, 2
        %v923 = vsel %vm425, %v922, %v921
        %v924 = vrot.slane %v819, 1
        %v925 = vsel %vm428, %v924, %v923
        %v926 = vrot.slane %v821, 7
        %v927 = vsel %vm410, %v926, %v820
        %v928 = vrot.slane %v822, 6
        %v929 = vsel %vm413, %v928, %v927
        %v930 = vrot.slane %v823, 5
        %v931 = vsel %vm416, %v930, %v929
        %v932 = vrot.slane %v824, 4
        %v933 = vsel %vm419, %v932, %v931
        %v934 = vrot.slane %v825, 3
        %v935 = vsel %vm422, %v934, %v933
        %v936 = vrot.slane %v826, 2
        %v937 = vsel %vm425, %v936, %v935
        %v938 = vrot.slane %v827, 1
        %v939 = vsel %vm428, %v938, %v937
        %v944 = vsel %vm848, %v897, 0.0
        %v945 = vsel %vm849, %v911, 0.0
        %v946 = vsel %vm850, %v925, 0.0
        %v947 = vsel %vm851, %v939, 0.0
        %v948 = vadd.f32 %v792, %v944
        %v949 = vadd.f32 %v793, %v945
        %v950 = vadd.f32 %v794, %v946
        %v951 = vadd.f32 %v795, %v947
        %v952 = vld [vmem:[%s301 + $0x4] sm:$0x1]
        %v953 = vld [vmem:[%s301 + $0xc] sm:$0x1]
        %v954 = vld [vmem:[%s301 + $0x14] sm:$0x1]
        %v955 = vld [vmem:[%s301 + $0x1c] sm:$0x1]
        %v956 = vld [vmem:[%s301 + $0x24] sm:$0x1]
        %v957 = vld [vmem:[%s301 + $0x2c] sm:$0x1]
        %v958 = vld [vmem:[%s301 + $0x34] sm:$0x1]
        %v959 = vld [vmem:[%s301 + $0x3c] sm:$0x1]
        %v960 = vld [vmem:[%s301 + $0x44] sm:$0x1]
        %v961 = vld [vmem:[%s301 + $0x4c] sm:$0x1]
        %v962 = vld [vmem:[%s301 + $0x54] sm:$0x1]
        %v963 = vld [vmem:[%s301 + $0x5c] sm:$0x1]
        %v964 = vld [vmem:[%s301 + $0x64] sm:$0x1]
        %v965 = vld [vmem:[%s301 + $0x6c] sm:$0x1]
        %v966 = vld [vmem:[%s301 + $0x74] sm:$0x1]
        %v967 = vld [vmem:[%s301 + $0x7c] sm:$0x1]
        %v968 = vld [vmem:[%s301 + $0x84] sm:$0x1]
        %v969 = vld [vmem:[%s301 + $0x8c] sm:$0x1]
        %v970 = vld [vmem:[%s301 + $0x94] sm:$0x1]
        %v971 = vld [vmem:[%s301 + $0x9c] sm:$0x1]
        %v972 = vld [vmem:[%s301 + $0xa4] sm:$0x1]
        %v973 = vld [vmem:[%s301 + $0xac] sm:$0x1]
        %v974 = vld [vmem:[%s301 + $0xb4] sm:$0x1]
        %v975 = vld [vmem:[%s301 + $0xbc] sm:$0x1]
        %v976 = vld [vmem:[%s301 + $0xc4] sm:$0x1]
        %v977 = vld [vmem:[%s301 + $0xcc] sm:$0x1]
        %v978 = vld [vmem:[%s301 + $0xd4] sm:$0x1]
        %v979 = vld [vmem:[%s301 + $0xdc] sm:$0x1]
        %v980 = vld [vmem:[%s301 + $0xe4] sm:$0x1]
        %v981 = vld [vmem:[%s301 + $0xec] sm:$0x1]
        %v982 = vld [vmem:[%s301 + $0xf4] sm:$0x1]
        %v983 = vld [vmem:[%s301 + $0xfc] sm:$0x1]
        %vm984 = vcmp.lt.f32.partialorder 4.0, %v317
        %vm985 = vcmp.lt.f32.partialorder 4.0, %v318
        %vm986 = vcmp.lt.f32.partialorder 4.0, %v319
        %vm987 = vcmp.lt.f32.partialorder 4.0, %v320
        %v988 = vsel %vm984, 1, 0
        %v989 = vsel %vm985, 1, 0
        %v990 = vsel %vm986, 1, 0
        %v991 = vsel %vm987, 1, 0
        %992 = vset.pattern.permute.xlu0 0
        %993 = vperm.xlu0 %992, %v988
        %v994 = vpop.permute.xlu0 %993
        %995 = vset.pattern.permute.xlu0 0
        %996 = vperm.xlu0 %995, %v989
        %v997 = vpop.permute.xlu0 %996
        %998 = vset.pattern.permute.xlu0 0
        %999 = vperm.xlu0 %998, %v990
        %v1000 = vpop.permute.xlu0 %999
        %1001 = vset.pattern.permute.xlu0 0
        %1002 = vperm.xlu0 %1001, %v991
        %v1003 = vpop.permute.xlu0 %1002
        %vm1004 = vcmp.eq.s32.totalorder %v994, 1
        %vm1005 = vcmp.eq.s32.totalorder %v997, 1
        %vm1006 = vcmp.eq.s32.totalorder %v1000, 1
        %vm1007 = vcmp.eq.s32.totalorder %v1003, 1
        %v1040 = vrot.slane %v953, 7
        %v1041 = vsel %vm410, %v1040, %v952
        %v1042 = vrot.slane %v954, 6
        %v1043 = vsel %vm413, %v1042, %v1041
        %v1044 = vrot.slane %v955, 5
        %v1045 = vsel %vm416, %v1044, %v1043
        %v1046 = vrot.slane %v956, 4
        %v1047 = vsel %vm419, %v1046, %v1045
        %v1048 = vrot.slane %v957, 3
        %v1049 = vsel %vm422, %v1048, %v1047
        %v1050 = vrot.slane %v958, 2
        %v1051 = vsel %vm425, %v1050, %v1049
        %v1052 = vrot.slane %v959, 1
        %v1053 = vsel %vm428, %v1052, %v1051
        %v1054 = vrot.slane %v961, 7
        %v1055 = vsel %vm410, %v1054, %v960
        %v1056 = vrot.slane %v962, 6
        %v1057 = vsel %vm413, %v1056, %v1055
        %v1058 = vrot.slane %v963, 5
        %v1059 = vsel %vm416, %v1058, %v1057
        %v1060 = vrot.slane %v964, 4
        %v1061 = vsel %vm419, %v1060, %v1059
        %v1062 = vrot.slane %v965, 3
        %v1063 = vsel %vm422, %v1062, %v1061
        %v1064 = vrot.slane %v966, 2
        %v1065 = vsel %vm425, %v1064, %v1063
        %v1066 = vrot.slane %v967, 1
        %v1067 = vsel %vm428, %v1066, %v1065
        %v1068 = vrot.slane %v969, 7
        %v1069 = vsel %vm410, %v1068, %v968
        %v1070 = vrot.slane %v970, 6
        %v1071 = vsel %vm413, %v1070, %v1069
        %v1072 = vrot.slane %v971, 5
        %v1073 = vsel %vm416, %v1072, %v1071
        %v1074 = vrot.slane %v972, 4
        %v1075 = vsel %vm419, %v1074, %v1073
        %v1076 = vrot.slane %v973, 3
        %v1077 = vsel %vm422, %v1076, %v1075
        %v1078 = vrot.slane %v974, 2
        %v1079 = vsel %vm425, %v1078, %v1077
        %v1080 = vrot.slane %v975, 1
        %v1081 = vsel %vm428, %v1080, %v1079
        %v1082 = vrot.slane %v977, 7
        %v1083 = vsel %vm410, %v1082, %v976
        %v1084 = vrot.slane %v978, 6
        %v1085 = vsel %vm413, %v1084, %v1083
        %v1086 = vrot.slane %v979, 5
        %v1087 = vsel %vm416, %v1086, %v1085
        %v1088 = vrot.slane %v980, 4
        %v1089 = vsel %vm419, %v1088, %v1087
        %v1090 = vrot.slane %v981, 3
        %v1091 = vsel %vm422, %v1090, %v1089
        %v1092 = vrot.slane %v982, 2
        %v1093 = vsel %vm425, %v1092, %v1091
        %v1094 = vrot.slane %v983, 1
        %v1095 = vsel %vm428, %v1094, %v1093
        %v1100 = vsel %vm1004, %v1053, 0.0
        %v1101 = vsel %vm1005, %v1067, 0.0
        %v1102 = vsel %vm1006, %v1081, 0.0
        %v1103 = vsel %vm1007, %v1095, 0.0
        %v1104 = vadd.f32 %v948, %v1100
        %v1105 = vadd.f32 %v949, %v1101
        %v1106 = vadd.f32 %v950, %v1102
        %v1107 = vadd.f32 %v951, %v1103
        %v1108 = vld [vmem:[%s301 + $0x5] sm:$0x1]
        %v1109 = vld [vmem:[%s301 + $0xd] sm:$0x1]
        %v1110 = vld [vmem:[%s301 + $0x15] sm:$0x1]
        %v1111 = vld [vmem:[%s301 + $0x1d] sm:$0x1]
        %v1112 = vld [vmem:[%s301 + $0x25] sm:$0x1]
        %v1113 = vld [vmem:[%s301 + $0x2d] sm:$0x1]
        %v1114 = vld [vmem:[%s301 + $0x35] sm:$0x1]
        %v1115 = vld [vmem:[%s301 + $0x3d] sm:$0x1]
        %v1116 = vld [vmem:[%s301 + $0x45] sm:$0x1]
        %v1117 = vld [vmem:[%s301 + $0x4d] sm:$0x1]
        %v1118 = vld [vmem:[%s301 + $0x55] sm:$0x1]
        %v1119 = vld [vmem:[%s301 + $0x5d] sm:$0x1]
        %v1120 = vld [vmem:[%s301 + $0x65] sm:$0x1]
        %v1121 = vld [vmem:[%s301 + $0x6d] sm:$0x1]
        %v1122 = vld [vmem:[%s301 + $0x75] sm:$0x1]
        %v1123 = vld [vmem:[%s301 + $0x7d] sm:$0x1]
        %v1124 = vld [vmem:[%s301 + $0x85] sm:$0x1]
        %v1125 = vld [vmem:[%s301 + $0x8d] sm:$0x1]
        %v1126 = vld [vmem:[%s301 + $0x95] sm:$0x1]
        %v1127 = vld [vmem:[%s301 + $0x9d] sm:$0x1]
        %v1128 = vld [vmem:[%s301 + $0xa5] sm:$0x1]
        %v1129 = vld [vmem:[%s301 + $0xad] sm:$0x1]
        %v1130 = vld [vmem:[%s301 + $0xb5] sm:$0x1]
        %v1131 = vld [vmem:[%s301 + $0xbd] sm:$0x1]
        %v1132 = vld [vmem:[%s301 + $0xc5] sm:$0x1]
        %v1133 = vld [vmem:[%s301 + $0xcd] sm:$0x1]
        %v1134 = vld [vmem:[%s301 + $0xd5] sm:$0x1]
        %v1135 = vld [vmem:[%s301 + $0xdd] sm:$0x1]
        %v1136 = vld [vmem:[%s301 + $0xe5] sm:$0x1]
        %v1137 = vld [vmem:[%s301 + $0xed] sm:$0x1]
        %v1138 = vld [vmem:[%s301 + $0xf5] sm:$0x1]
        %v1139 = vld [vmem:[%s301 + $0xfd] sm:$0x1]
        %vm1140 = vcmp.lt.f32.partialorder 5.0, %v317
        %vm1141 = vcmp.lt.f32.partialorder 5.0, %v318
        %vm1142 = vcmp.lt.f32.partialorder 5.0, %v319
        %vm1143 = vcmp.lt.f32.partialorder 5.0, %v320
        %v1144 = vsel %vm1140, 1, 0
        %v1145 = vsel %vm1141, 1, 0
        %v1146 = vsel %vm1142, 1, 0
        %v1147 = vsel %vm1143, 1, 0
        %1148 = vset.pattern.permute.xlu0 0
        %1149 = vperm.xlu0 %1148, %v1144
        %v1150 = vpop.permute.xlu0 %1149
        %1151 = vset.pattern.permute.xlu0 0
        %1152 = vperm.xlu0 %1151, %v1145
        %v1153 = vpop.permute.xlu0 %1152
        %1154 = vset.pattern.permute.xlu0 0
        %1155 = vperm.xlu0 %1154, %v1146
        %v1156 = vpop.permute.xlu0 %1155
        %1157 = vset.pattern.permute.xlu0 0
        %1158 = vperm.xlu0 %1157, %v1147
        %v1159 = vpop.permute.xlu0 %1158
        %vm1160 = vcmp.eq.s32.totalorder %v1150, 1
        %vm1161 = vcmp.eq.s32.totalorder %v1153, 1
        %vm1162 = vcmp.eq.s32.totalorder %v1156, 1
        %vm1163 = vcmp.eq.s32.totalorder %v1159, 1
        %v1196 = vrot.slane %v1109, 7
        %v1197 = vsel %vm410, %v1196, %v1108
        %v1198 = vrot.slane %v1110, 6
        %v1199 = vsel %vm413, %v1198, %v1197
        %v1200 = vrot.slane %v1111, 5
        %v1201 = vsel %vm416, %v1200, %v1199
        %v1202 = vrot.slane %v1112, 4
        %v1203 = vsel %vm419, %v1202, %v1201
        %v1204 = vrot.slane %v1113, 3
        %v1205 = vsel %vm422, %v1204, %v1203
        %v1206 = vrot.slane %v1114, 2
        %v1207 = vsel %vm425, %v1206, %v1205
        %v1208 = vrot.slane %v1115, 1
        %v1209 = vsel %vm428, %v1208, %v1207
        %v1210 = vrot.slane %v1117, 7
        %v1211 = vsel %vm410, %v1210, %v1116
        %v1212 = vrot.slane %v1118, 6
        %v1213 = vsel %vm413, %v1212, %v1211
        %v1214 = vrot.slane %v1119, 5
        %v1215 = vsel %vm416, %v1214, %v1213
        %v1216 = vrot.slane %v1120, 4
        %v1217 = vsel %vm419, %v1216, %v1215
        %v1218 = vrot.slane %v1121, 3
        %v1219 = vsel %vm422, %v1218, %v1217
        %v1220 = vrot.slane %v1122, 2
        %v1221 = vsel %vm425, %v1220, %v1219
        %v1222 = vrot.slane %v1123, 1
        %v1223 = vsel %vm428, %v1222, %v1221
        %v1224 = vrot.slane %v1125, 7
        %v1225 = vsel %vm410, %v1224, %v1124
        %v1226 = vrot.slane %v1126, 6
        %v1227 = vsel %vm413, %v1226, %v1225
        %v1228 = vrot.slane %v1127, 5
        %v1229 = vsel %vm416, %v1228, %v1227
        %v1230 = vrot.slane %v1128, 4
        %v1231 = vsel %vm419, %v1230, %v1229
        %v1232 = vrot.slane %v1129, 3
        %v1233 = vsel %vm422, %v1232, %v1231
        %v1234 = vrot.slane %v1130, 2
        %v1235 = vsel %vm425, %v1234, %v1233
        %v1236 = vrot.slane %v1131, 1
        %v1237 = vsel %vm428, %v1236, %v1235
        %v1238 = vrot.slane %v1133, 7
        %v1239 = vsel %vm410, %v1238, %v1132
        %v1240 = vrot.slane %v1134, 6
        %v1241 = vsel %vm413, %v1240, %v1239
        %v1242 = vrot.slane %v1135, 5
        %v1243 = vsel %vm416, %v1242, %v1241
        %v1244 = vrot.slane %v1136, 4
        %v1245 = vsel %vm419, %v1244, %v1243
        %v1246 = vrot.slane %v1137, 3
        %v1247 = vsel %vm422, %v1246, %v1245
        %v1248 = vrot.slane %v1138, 2
        %v1249 = vsel %vm425, %v1248, %v1247
        %v1250 = vrot.slane %v1139, 1
        %v1251 = vsel %vm428, %v1250, %v1249
        %v1256 = vsel %vm1160, %v1209, 0.0
        %v1257 = vsel %vm1161, %v1223, 0.0
        %v1258 = vsel %vm1162, %v1237, 0.0
        %v1259 = vsel %vm1163, %v1251, 0.0
        %v1260 = vadd.f32 %v1104, %v1256
        %v1261 = vadd.f32 %v1105, %v1257
        %v1262 = vadd.f32 %v1106, %v1258
        %v1263 = vadd.f32 %v1107, %v1259
        %v1264 = vld [vmem:[%s301 + $0x6] sm:$0x1]
        %v1265 = vld [vmem:[%s301 + $0xe] sm:$0x1]
        %v1266 = vld [vmem:[%s301 + $0x16] sm:$0x1]
        %v1267 = vld [vmem:[%s301 + $0x1e] sm:$0x1]
        %v1268 = vld [vmem:[%s301 + $0x26] sm:$0x1]
        %v1269 = vld [vmem:[%s301 + $0x2e] sm:$0x1]
        %v1270 = vld [vmem:[%s301 + $0x36] sm:$0x1]
        %v1271 = vld [vmem:[%s301 + $0x3e] sm:$0x1]
        %v1272 = vld [vmem:[%s301 + $0x46] sm:$0x1]
        %v1273 = vld [vmem:[%s301 + $0x4e] sm:$0x1]
        %v1274 = vld [vmem:[%s301 + $0x56] sm:$0x1]
        %v1275 = vld [vmem:[%s301 + $0x5e] sm:$0x1]
        %v1276 = vld [vmem:[%s301 + $0x66] sm:$0x1]
        %v1277 = vld [vmem:[%s301 + $0x6e] sm:$0x1]
        %v1278 = vld [vmem:[%s301 + $0x76] sm:$0x1]
        %v1279 = vld [vmem:[%s301 + $0x7e] sm:$0x1]
        %v1280 = vld [vmem:[%s301 + $0x86] sm:$0x1]
        %v1281 = vld [vmem:[%s301 + $0x8e] sm:$0x1]
        %v1282 = vld [vmem:[%s301 + $0x96] sm:$0x1]
        %v1283 = vld [vmem:[%s301 + $0x9e] sm:$0x1]
        %v1284 = vld [vmem:[%s301 + $0xa6] sm:$0x1]
        %v1285 = vld [vmem:[%s301 + $0xae] sm:$0x1]
        %v1286 = vld [vmem:[%s301 + $0xb6] sm:$0x1]
        %v1287 = vld [vmem:[%s301 + $0xbe] sm:$0x1]
        %v1288 = vld [vmem:[%s301 + $0xc6] sm:$0x1]
        %v1289 = vld [vmem:[%s301 + $0xce] sm:$0x1]
        %v1290 = vld [vmem:[%s301 + $0xd6] sm:$0x1]
        %v1291 = vld [vmem:[%s301 + $0xde] sm:$0x1]
        %v1292 = vld [vmem:[%s301 + $0xe6] sm:$0x1]
        %v1293 = vld [vmem:[%s301 + $0xee] sm:$0x1]
        %v1294 = vld [vmem:[%s301 + $0xf6] sm:$0x1]
        %v1295 = vld [vmem:[%s301 + $0xfe] sm:$0x1]
        %vm1296 = vcmp.lt.f32.partialorder 6.0, %v317
        %vm1297 = vcmp.lt.f32.partialorder 6.0, %v318
        %vm1298 = vcmp.lt.f32.partialorder 6.0, %v319
        %vm1299 = vcmp.lt.f32.partialorder 6.0, %v320
        %v1300 = vsel %vm1296, 1, 0
        %v1301 = vsel %vm1297, 1, 0
        %v1302 = vsel %vm1298, 1, 0
        %v1303 = vsel %vm1299, 1, 0
        %1304 = vset.pattern.permute.xlu0 0
        %1305 = vperm.xlu0 %1304, %v1300
        %v1306 = vpop.permute.xlu0 %1305
        %1307 = vset.pattern.permute.xlu0 0
        %1308 = vperm.xlu0 %1307, %v1301
        %v1309 = vpop.permute.xlu0 %1308
        %1310 = vset.pattern.permute.xlu0 0
        %1311 = vperm.xlu0 %1310, %v1302
        %v1312 = vpop.permute.xlu0 %1311
        %1313 = vset.pattern.permute.xlu0 0
        %1314 = vperm.xlu0 %1313, %v1303
        %v1315 = vpop.permute.xlu0 %1314
        %vm1316 = vcmp.eq.s32.totalorder %v1306, 1
        %vm1317 = vcmp.eq.s32.totalorder %v1309, 1
        %vm1318 = vcmp.eq.s32.totalorder %v1312, 1
        %vm1319 = vcmp.eq.s32.totalorder %v1315, 1
        %v1352 = vrot.slane %v1265, 7
        %v1353 = vsel %vm410, %v1352, %v1264
        %v1354 = vrot.slane %v1266, 6
        %v1355 = vsel %vm413, %v1354, %v1353
        %v1356 = vrot.slane %v1267, 5
        %v1357 = vsel %vm416, %v1356, %v1355
        %v1358 = vrot.slane %v1268, 4
        %v1359 = vsel %vm419, %v1358, %v1357
        %v1360 = vrot.slane %v1269, 3
        %v1361 = vsel %vm422, %v1360, %v1359
        %v1362 = vrot.slane %v1270, 2
        %v1363 = vsel %vm425, %v1362, %v1361
        %v1364 = vrot.slane %v1271, 1
        %v1365 = vsel %vm428, %v1364, %v1363
        %v1366 = vrot.slane %v1273, 7
        %v1367 = vsel %vm410, %v1366, %v1272
        %v1368 = vrot.slane %v1274, 6
        %v1369 = vsel %vm413, %v1368, %v1367
        %v1370 = vrot.slane %v1275, 5
        %v1371 = vsel %vm416, %v1370, %v1369
        %v1372 = vrot.slane %v1276, 4
        %v1373 = vsel %vm419, %v1372, %v1371
        %v1374 = vrot.slane %v1277, 3
        %v1375 = vsel %vm422, %v1374, %v1373
        %v1376 = vrot.slane %v1278, 2
        %v1377 = vsel %vm425, %v1376, %v1375
        %v1378 = vrot.slane %v1279, 1
        %v1379 = vsel %vm428, %v1378, %v1377
        %v1380 = vrot.slane %v1281, 7
        %v1381 = vsel %vm410, %v1380, %v1280
        %v1382 = vrot.slane %v1282, 6
        %v1383 = vsel %vm413, %v1382, %v1381
        %v1384 = vrot.slane %v1283, 5
        %v1385 = vsel %vm416, %v1384, %v1383
        %v1386 = vrot.slane %v1284, 4
        %v1387 = vsel %vm419, %v1386, %v1385
        %v1388 = vrot.slane %v1285, 3
        %v1389 = vsel %vm422, %v1388, %v1387
        %v1390 = vrot.slane %v1286, 2
        %v1391 = vsel %vm425, %v1390, %v1389
        %v1392 = vrot.slane %v1287, 1
        %v1393 = vsel %vm428, %v1392, %v1391
        %v1394 = vrot.slane %v1289, 7
        %v1395 = vsel %vm410, %v1394, %v1288
        %v1396 = vrot.slane %v1290, 6
        %v1397 = vsel %vm413, %v1396, %v1395
        %v1398 = vrot.slane %v1291, 5
        %v1399 = vsel %vm416, %v1398, %v1397
        %v1400 = vrot.slane %v1292, 4
        %v1401 = vsel %vm419, %v1400, %v1399
        %v1402 = vrot.slane %v1293, 3
        %v1403 = vsel %vm422, %v1402, %v1401
        %v1404 = vrot.slane %v1294, 2
        %v1405 = vsel %vm425, %v1404, %v1403
        %v1406 = vrot.slane %v1295, 1
        %v1407 = vsel %vm428, %v1406, %v1405
        %v1412 = vsel %vm1316, %v1365, 0.0
        %v1413 = vsel %vm1317, %v1379, 0.0
        %v1414 = vsel %vm1318, %v1393, 0.0
        %v1415 = vsel %vm1319, %v1407, 0.0
        %v1416 = vadd.f32 %v1260, %v1412
        %v1417 = vadd.f32 %v1261, %v1413
        %v1418 = vadd.f32 %v1262, %v1414
        %v1419 = vadd.f32 %v1263, %v1415
        %v1420 = vld [vmem:[%s301 + $0x7] sm:$0x1]
        %v1421 = vld [vmem:[%s301 + $0xf] sm:$0x1]
        %v1422 = vld [vmem:[%s301 + $0x17] sm:$0x1]
        %v1423 = vld [vmem:[%s301 + $0x1f] sm:$0x1]
        %v1424 = vld [vmem:[%s301 + $0x27] sm:$0x1]
        %v1425 = vld [vmem:[%s301 + $0x2f] sm:$0x1]
        %v1426 = vld [vmem:[%s301 + $0x37] sm:$0x1]
        %v1427 = vld [vmem:[%s301 + $0x3f] sm:$0x1]
        %v1428 = vld [vmem:[%s301 + $0x47] sm:$0x1]
        %v1429 = vld [vmem:[%s301 + $0x4f] sm:$0x1]
        %v1430 = vld [vmem:[%s301 + $0x57] sm:$0x1]
        %v1431 = vld [vmem:[%s301 + $0x5f] sm:$0x1]
        %v1432 = vld [vmem:[%s301 + $0x67] sm:$0x1]
        %v1433 = vld [vmem:[%s301 + $0x6f] sm:$0x1]
        %v1434 = vld [vmem:[%s301 + $0x77] sm:$0x1]
        %v1435 = vld [vmem:[%s301 + $0x7f] sm:$0x1]
        %v1436 = vld [vmem:[%s301 + $0x87] sm:$0x1]
        %v1437 = vld [vmem:[%s301 + $0x8f] sm:$0x1]
        %v1438 = vld [vmem:[%s301 + $0x97] sm:$0x1]
        %v1439 = vld [vmem:[%s301 + $0x9f] sm:$0x1]
        %v1440 = vld [vmem:[%s301 + $0xa7] sm:$0x1]
        %v1441 = vld [vmem:[%s301 + $0xaf] sm:$0x1]
        %v1442 = vld [vmem:[%s301 + $0xb7] sm:$0x1]
        %v1443 = vld [vmem:[%s301 + $0xbf] sm:$0x1]
        %v1444 = vld [vmem:[%s301 + $0xc7] sm:$0x1]
        %v1445 = vld [vmem:[%s301 + $0xcf] sm:$0x1]
        %v1446 = vld [vmem:[%s301 + $0xd7] sm:$0x1]
        %v1447 = vld [vmem:[%s301 + $0xdf] sm:$0x1]
        %v1448 = vld [vmem:[%s301 + $0xe7] sm:$0x1]
        %v1449 = vld [vmem:[%s301 + $0xef] sm:$0x1]
        %v1450 = vld [vmem:[%s301 + $0xf7] sm:$0x1]
        %v1451 = vld [vmem:[%s301 + $0xff] sm:$0x1]
        %vm1452 = vcmp.lt.f32.partialorder 7.0, %v317
        %vm1453 = vcmp.lt.f32.partialorder 7.0, %v318
        %vm1454 = vcmp.lt.f32.partialorder 7.0, %v319
        %vm1455 = vcmp.lt.f32.partialorder 7.0, %v320
        %v1456 = vsel %vm1452, 1, 0
        %v1457 = vsel %vm1453, 1, 0
        %v1458 = vsel %vm1454, 1, 0
        %v1459 = vsel %vm1455, 1, 0
        %1460 = vset.pattern.permute.xlu0 0
        %1461 = vperm.xlu0 %1460, %v1456
        %v1462 = vpop.permute.xlu0 %1461
        %1463 = vset.pattern.permute.xlu0 0
        %1464 = vperm.xlu0 %1463, %v1457
        %v1465 = vpop.permute.xlu0 %1464
        %1466 = vset.pattern.permute.xlu0 0
        %1467 = vperm.xlu0 %1466, %v1458
        %v1468 = vpop.permute.xlu0 %1467
        %1469 = vset.pattern.permute.xlu0 0
        %1470 = vperm.xlu0 %1469, %v1459
        %v1471 = vpop.permute.xlu0 %1470
        %vm1472 = vcmp.eq.s32.totalorder %v1462, 1
        %vm1473 = vcmp.eq.s32.totalorder %v1465, 1
        %vm1474 = vcmp.eq.s32.totalorder %v1468, 1
        %vm1475 = vcmp.eq.s32.totalorder %v1471, 1
        %v1508 = vrot.slane %v1421, 7
        %v1509 = vsel %vm410, %v1508, %v1420
        %v1510 = vrot.slane %v1422, 6
        %v1511 = vsel %vm413, %v1510, %v1509
        %v1512 = vrot.slane %v1423, 5
        %v1513 = vsel %vm416, %v1512, %v1511
        %v1514 = vrot.slane %v1424, 4
        %v1515 = vsel %vm419, %v1514, %v1513
        %v1516 = vrot.slane %v1425, 3
        %v1517 = vsel %vm422, %v1516, %v1515
        %v1518 = vrot.slane %v1426, 2
        %v1519 = vsel %vm425, %v1518, %v1517
        %v1520 = vrot.slane %v1427, 1
        %v1521 = vsel %vm428, %v1520, %v1519
        %v1522 = vrot.slane %v1429, 7
        %v1523 = vsel %vm410, %v1522, %v1428
        %v1524 = vrot.slane %v1430, 6
        %v1525 = vsel %vm413, %v1524, %v1523
        %v1526 = vrot.slane %v1431, 5
        %v1527 = vsel %vm416, %v1526, %v1525
        %v1528 = vrot.slane %v1432, 4
        %v1529 = vsel %vm419, %v1528, %v1527
        %v1530 = vrot.slane %v1433, 3
        %v1531 = vsel %vm422, %v1530, %v1529
        %v1532 = vrot.slane %v1434, 2
        %v1533 = vsel %vm425, %v1532, %v1531
        %v1534 = vrot.slane %v1435, 1
        %v1535 = vsel %vm428, %v1534, %v1533
        %v1536 = vrot.slane %v1437, 7
        %v1537 = vsel %vm410, %v1536, %v1436
        %v1538 = vrot.slane %v1438, 6
        %v1539 = vsel %vm413, %v1538, %v1537
        %v1540 = vrot.slane %v1439, 5
        %v1541 = vsel %vm416, %v1540, %v1539
        %v1542 = vrot.slane %v1440, 4
        %v1543 = vsel %vm419, %v1542, %v1541
        %v1544 = vrot.slane %v1441, 3
        %v1545 = vsel %vm422, %v1544, %v1543
        %v1546 = vrot.slane %v1442, 2
        %v1547 = vsel %vm425, %v1546, %v1545
        %v1548 = vrot.slane %v1443, 1
        %v1549 = vsel %vm428, %v1548, %v1547
        %v1550 = vrot.slane %v1445, 7
        %v1551 = vsel %vm410, %v1550, %v1444
        %v1552 = vrot.slane %v1446, 6
        %v1553 = vsel %vm413, %v1552, %v1551
        %v1554 = vrot.slane %v1447, 5
        %v1555 = vsel %vm416, %v1554, %v1553
        %v1556 = vrot.slane %v1448, 4
        %v1557 = vsel %vm419, %v1556, %v1555
        %v1558 = vrot.slane %v1449, 3
        %v1559 = vsel %vm422, %v1558, %v1557
        %v1560 = vrot.slane %v1450, 2
        %v1561 = vsel %vm425, %v1560, %v1559
        %v1562 = vrot.slane %v1451, 1
        %v1563 = vsel %vm428, %v1562, %v1561
        %v1568 = vsel %vm1472, %v1521, 0.0
        %v1569 = vsel %vm1473, %v1535, 0.0
        %v1570 = vsel %vm1474, %v1549, 0.0
        %v1571 = vsel %vm1475, %v1563, 0.0
        %v1572 = vadd.f32 %v1416, %v1568
        %v1573 = vadd.f32 %v1417, %v1569
        %v1574 = vadd.f32 %v1418, %v1570
        %v1575 = vadd.f32 %v1419, %v1571
        %v1576 = vmax.f32 %v317, 1.0
        %v1577 = vmax.f32 %v318, 1.0
        %v1578 = vmax.f32 %v319, 1.0
        %v1579 = vmax.f32 %v320, 1.0
        %1581 = vset.pattern.permute.xlu0 0
        %1582 = vperm.xlu0 %1581, %v1576
        %v1583 = vpop.permute.xlu0 %1582
        %1586 = vset.pattern.permute.xlu0 0
        %1587 = vperm.xlu0 %1586, %v1577
        %v1588 = vpop.permute.xlu0 %1587
        %1591 = vset.pattern.permute.xlu0 0
        %1592 = vperm.xlu0 %1591, %v1578
        %v1593 = vpop.permute.xlu0 %1592
        %1596 = vset.pattern.permute.xlu0 0
        %1597 = vperm.xlu0 %1596, %v1579
        %v1598 = vpop.permute.xlu0 %1597
        %v1600 = vrcp.pop %v1583
        %v1601 = vmul.f32 %v1583, %v1600
        %v1602 = vsub.f32 1.0, %v1601
        %v1603 = vmul.f32 %v1600, %v1602
        %v1604 = vadd.f32 %v1600, %v1603
        %vm1605 = vweird.f32 %v1583
        %vm1606 = vweird.f32 %v1600
        %vm1607 = vmor %vm1605, %vm1606
        %v1608 = vsel %vm1607, %v1600, %v1604
        %v1609 = vand.u32 2147483647, %v1583
        %vm1610 = vcmp.eq.f32.partialorder %v1609, 8.507059e+37
        %v1611 = vand.u32 %v1583, 2147483648
        %v1612 = vor.u32 1.1754944e-38, %v1611
        %v1613 = vsel %vm1610, %v1612, %v1608
        %v1614 = vmul.f32 %v1572, %v1613
        %v1615 = vrcp.pop %v1588
        %v1616 = vmul.f32 %v1588, %v1615
        %v1617 = vsub.f32 1.0, %v1616
        %v1618 = vmul.f32 %v1615, %v1617
        %v1619 = vadd.f32 %v1615, %v1618
        %vm1620 = vweird.f32 %v1588
        %vm1621 = vweird.f32 %v1615
        %vm1622 = vmor %vm1620, %vm1621
        %v1623 = vsel %vm1622, %v1615, %v1619
        %v1624 = vand.u32 2147483647, %v1588
        %vm1625 = vcmp.eq.f32.partialorder %v1624, 8.507059e+37
        %v1626 = vand.u32 %v1588, 2147483648
        %v1627 = vor.u32 1.1754944e-38, %v1626
        %v1628 = vsel %vm1625, %v1627, %v1623
        %v1629 = vmul.f32 %v1573, %v1628
        %v1630 = vrcp.pop %v1593
        %v1631 = vmul.f32 %v1593, %v1630
        %v1632 = vsub.f32 1.0, %v1631
        %v1633 = vmul.f32 %v1630, %v1632
        %v1634 = vadd.f32 %v1630, %v1633
        %vm1635 = vweird.f32 %v1593
        %vm1636 = vweird.f32 %v1630
        %vm1637 = vmor %vm1635, %vm1636
        %v1638 = vsel %vm1637, %v1630, %v1634
        %v1639 = vand.u32 2147483647, %v1593
        %vm1640 = vcmp.eq.f32.partialorder %v1639, 8.507059e+37
        %v1641 = vand.u32 %v1593, 2147483648
        %v1642 = vor.u32 1.1754944e-38, %v1641
        %v1643 = vsel %vm1640, %v1642, %v1638
        %v1644 = vmul.f32 %v1574, %v1643
        %v1645 = vrcp.pop %v1598
        %v1646 = vmul.f32 %v1598, %v1645
        %v1647 = vsub.f32 1.0, %v1646
        %v1648 = vmul.f32 %v1645, %v1647
        %v1649 = vadd.f32 %v1645, %v1648
        %vm1650 = vweird.f32 %v1598
        %vm1651 = vweird.f32 %v1645
        %vm1652 = vmor %vm1650, %vm1651
        %v1653 = vsel %vm1652, %v1645, %v1649
        %v1654 = vand.u32 2147483647, %v1598
        %vm1655 = vcmp.eq.f32.partialorder %v1654, 8.507059e+37
        %v1656 = vand.u32 %v1598, 2147483648
        %v1657 = vor.u32 1.1754944e-38, %v1656
        %v1658 = vsel %vm1655, %v1657, %v1653
        %v1659 = vmul.f32 %v1575, %v1658
        %vm1660 = vcmask 31744
        %1661 = vst.msk [vmem:[%s313] sm:$0xff] %vm1660, %v1614
        %1662 = vst.msk [vmem:[%s313 + $0x8] sm:$0xff] %vm1660, %v1629
        %1663 = vst.msk [vmem:[%s313 + $0x10] sm:$0xff] %vm1660, %v1644
        %1664 = vst.msk [vmem:[%s313 + $0x18] sm:$0xff] %vm1660, %v1659
        %v1665 = vpack.c.bf16 %v1629, %v1614
        %v1666 = vpack.c.bf16 %v1659, %v1644
        %v1667 = vld [vmem:[%s2] sm:$0x3]
        %v1668 = vld [vmem:[%s3] sm:$0x1]
        %v1670 = vperm.slane %v1668, 0
        %v1673 = vsel %vm1660, %v1665, 0
        %v1676 = vsel %vm1660, %v1666, 0
        %vm1678 = vcmask 1041408
        %v1680 = vsel %vm1678, %v1667, 0
        %1682 = vmatpush.bf16.msra.mxu0 0
        %1683 = vmatpush.bf16.msra.mxu0 0
        %1684 = vmatpush.bf16.msra.mxu0 0
        %1685 = vmatpush.bf16.msra.mxu0 0
        %1686 = vmatpush.bf16.msra.mxu0 0
        %1687 = vmatpush.bf16.msra.mxu0 0
        %1688 = vmatpush.bf16.msra.mxu0 0
        %1689 = vmatpush.bf16.msra.mxu0 %v1680
        %1690 = vmatmul.bf16.gmra.mxu0 %v1673
        %v1691 = vpop.f32.mrf.mxu0
        %v1692 = vadd.f32 %v1670, %v1691
        %v1693 = vpop.f32.mrf.mxu0
        %v1694 = vadd.f32 %v1670, %v1693
        %1695 = vmatmul.bf16.gmra.mxu0 %v1676
        %v1696 = vpop.f32.mrf.mxu0
        %v1697 = vadd.f32 %v1670, %v1696
        %v1698 = vpop.f32.mrf.mxu0
        %v1699 = vadd.f32 %v1670, %v1698
        %1700 = vdwg.mxu0
        %v1701 = vmax.f32 %v1692, 0.0
        %v1702 = vmax.f32 %v1694, 0.0
        %v1703 = vmax.f32 %v1697, 0.0
        %v1704 = vmax.f32 %v1699, 0.0
        %v1705 = vpack.c.bf16 %v1702, %v1701
        %v1706 = vpack.c.bf16 %v1704, %v1703
        %v1707 = vld [vmem:[%s4] sm:$0xf]
        %v1708 = vld [vmem:[%s4 + $0x4] sm:$0xf]
        %v1709 = vld [vmem:[%s4 + $0x8] sm:$0xf]
        %v1710 = vld [vmem:[%s4 + $0xc] sm:$0xf]
        %v1711 = vld [vmem:[%s5] sm:$0x1]
        %v1713 = vperm.slane %v1711, 0
        %v1719 = vunpack.c.l.b16 %v1707
        %v1720 = vunpack.c.l.b16 %v1708
        %v1721 = vunpack.c.l.b16 %v1709
        %v1722 = vunpack.c.l.b16 %v1710
        %v1723 = vpack.c.b16 %v1720, %v1719
        %v1724 = vpack.c.b16 %v1722, %v1721
        %vm1727 = vcmask 261120
        %v1729 = vsel %vm1727, %v1705, 0
        %v1732 = vsel %vm1727, %v1706, 0
        %1734 = vmatpush.bf16.msra.mxu0 0
        %1735 = vmatpush.bf16.msra.mxu0 0
        %1736 = vmatpush.bf16.msra.mxu0 0
        %1737 = vmatpush.bf16.msra.mxu0 0
        %1738 = vmatpush.bf16.msra.mxu0 0
        %1739 = vmatpush.bf16.msra.mxu0 0
        %1740 = vmatpush.bf16.msra.mxu0 %v1724
        %1741 = vmatpush.bf16.msra.mxu0 %v1723
        %1742 = vmatmul.bf16.gmra.mxu0 %v1729
        %v1743 = vpop.f32.mrf.mxu0
        %v1744 = vadd.f32 %v1713, %v1743
        %v1745 = vpop.f32.mrf.mxu0
        %v1746 = vadd.f32 %v1713, %v1745
        %1747 = vmatmul.bf16.gmra.mxu0 %v1732
        %v1748 = vpop.f32.mrf.mxu0
        %v1749 = vadd.f32 %v1713, %v1748
        %v1750 = vpop.f32.mrf.mxu0
        %v1751 = vadd.f32 %v1713, %v1750
        %1752 = vdwg.mxu0
        %v1753 = vmax.f32 %v1744, 0.0
        %v1754 = vmax.f32 %v1746, 0.0
        %v1755 = vmax.f32 %v1749, 0.0
        %v1756 = vmax.f32 %v1751, 0.0
        %v1757 = vpack.c.bf16 %v1753, %v1753
        %v1758 = vpack.c.bf16 %v1754, %v1754
        %v1759 = vpack.c.bf16 %v1755, %v1755
        %v1760 = vpack.c.bf16 %v1756, %v1756
        %1761 = vst [vmem:[%s296] sm:$0xf] %v1757
        %1762 = vst [vmem:[%s296 + $0x4] sm:$0xf] %v1758
        %1763 = vst [vmem:[%s296 + $0x8] sm:$0xf] %v1759
        %1764 = vst [vmem:[%s296 + $0xc] sm:$0xf] %v1760
        %s1765 = smul.u32 4, %s22
        %p1766 = scmp.lt.s32.totalorder %s1765, 7
        %s1767 = scalar_select %p1766, %s1765, 7
        %s1768 = smul.addr %s1767, 8
        %s1769 = scalar_lea.vmem %s6, %s1768
        %s1770 = sand.u32 %s192, 1
        %s1771 = scalar_lea.sflag [#allocation3], %s1770
        %s1772 = sand.u32 %s192, 1
        %s1773 = smul.addr %s1772, 16
        %s1774 = scalar_lea.vmem [#allocation2], %s1773
        // Predicated region
        $region45: #{tpu_custom_call.1} parent=43 // pred_check
          %p1775 = pneg %p176
        $region46: #{tpu_custom_call.1} parent=43 // pred_check_branch
          %1777 = sbr.rel (%p1775) target = $region48
        $region47: #{tpu_custom_call.1} parent=43 // pred_region
          %s1778 = smul.u32 4, %s22
        $region48: #{tpu_custom_call.1} parent=43 // pred_fallthru
          _
        // Predicated region
        $region49: #{tpu_custom_call.1} parent=43 // pred_check
          %p1779 = pneg %p202
        $region50: #{tpu_custom_call.1} parent=43 // pred_check_branch
          %1781 = sbr.rel (%p1779) target = $region52
        $region51: #{tpu_custom_call.1} parent=43 // pred_region
          %s1782 = smul.u32 4, %s22
          %1784 = vsyncadd %s1771, 0
          %s1785 = smul.addr %s1782, 4
          %s1786 = scalar_lea.hbm %s7, %s1785
          %s1787 = sshll.u32 %s1774, 4
          %s1788 = int_to_ptr.vmem [resolvable:$true] %s1787
          %s1789 = sshll.u32 %s1786, 4
          %s1790 = int_to_ptr.hbm [resolvable:$true] %s1789
          %1795 = dma.vmem_to_hbm [thread:$0]  %s1788, 256, %s1790, %s1771, 64, 64, 4
        $region52: #{tpu_custom_call.1} parent=43 // pred_fallthru
          _
      $region44: #{tpu_custom_call.1} parent=5 // pred_fallthru
        _
      %p1796 = scmp.le.s32.totalorder 2, %s17
      // Predicated region
      $region53: #{tpu_custom_call.1} parent=5 // pred_check
        %p1797 = pneg %p1796
      $region54: #{tpu_custom_call.1} parent=5 // pred_check_branch
        %1799 = sbr.rel (%p1797) target = $region56
      $region55: #{tpu_custom_call.1} parent=5 // pred_region
        %s1800 = ssub.s32 %s17, 2
        // Predicated region
        $region57: #{tpu_custom_call.1} parent=55 // pred_check
          %p1801 = pneg %p182
        $region58: #{tpu_custom_call.1} parent=55 // pred_check_branch
          %1803 = sbr.rel (%p1801) target = $region60
        $region59: #{tpu_custom_call.1} parent=55 // pred_region
          %s1804 = smul.u32 4, %s23
          %p1805 = scmp.lt.s32.totalorder %s1804, 7
          %s1806 = scalar_select %p1805, %s1804, 7
          %s1807 = smul.addr %s1806, 8
          %s1808 = scalar_lea.vmem %s6, %s1807
        $region60: #{tpu_custom_call.1} parent=55 // pred_fallthru
          _
        // Predicated region
        $region61: #{tpu_custom_call.1} parent=55 // pred_check
          %p1809 = pneg %p208
        $region62: #{tpu_custom_call.1} parent=55 // pred_check_branch
          %1811 = sbr.rel (%p1809) target = $region64
        $region63: #{tpu_custom_call.1} parent=55 // pred_region
          %s1812 = sand.u32 %s193, 1
          %s1813 = scalar_lea.sflag [#allocation3], %s1812
          %s1814 = sand.u32 %s193, 1
          %s1815 = smul.addr %s1814, 16
          %s1816 = scalar_lea.vmem [#allocation2], %s1815
          %1818 = dma.done %s1813, 256
        $region64: #{tpu_custom_call.1} parent=55 // pred_fallthru
          _
      $region56: #{tpu_custom_call.1} parent=5 // pred_fallthru
        _
    $region6: #{tpu_custom_call.1} parent=1 // loop_footer
      %s21 = sadd.s32 1, %s17
    $region7: #{tpu_custom_call.1} parent=1 // loop_footer_branch
      %16 = sbr.rel target = $region3
    $region8: #{tpu_custom_call.1} parent=1 // loop_exit
      _
    %1819 = vsyncpa [#allocation3], 1
    %s1820 = scalar_lea.sflag [#allocation3], 1
    %1821 = vsyncpa %s1820, 1

</llo_original>
